<compile_context>
chip_gen: v7x
topology: tpu7x:2x2x1
jax: 0.10.0
libtpu: 0.0.40
codegen_flags: <defaults>
</compile_context>

<pallas_src>
import math
from functools import partial

import jax
import jax.numpy as jnp
from jax.experimental import pallas as pl
from jax.experimental.pallas import tpu as pltpu

KERNEL_SIZE = 3
DILATION = 2
PAD = 2                # = DILATION * (KERNEL_SIZE - 1) // 2
CHANNEL = 32           # ECRF internal channel count
D_MODEL = CHANNEL      # PositionEncode d_model
CH_CHUNK = 8           # one sublane tile of channels per feature_score step


def _round_up(x, m):
    return (x + m - 1) // m * m


def _vmem_limit_bytes():
    """Generation-aware VMEM budget: ~75% of physical, capped at 100 MiB."""
    try:
        cap = pltpu.get_tpu_info().vmem_capacity_bytes
        return int(min(cap * 3 // 4, 100 * 1024 * 1024))
    except Exception:
        return 48 * 1024 * 1024   # safe everywhere (v7x physical is 64 MiB)


def _shifted_em_dot(em_img_ref, em_pos_ref, shift, npad):
    """g[i] = sum_c em[c, i] * em[c, (i + o) mod npad], shift == (-o) % npad.

    Running accumulation over 8-channel chunks loaded from VMEM (bounds vreg
    live ranges), shifts on the XLU via pltpu.roll, one sublane reduce at the
    end (instead of one per chunk).
    """
    p8 = jnp.zeros((CH_CHUNK, npad), jnp.float32)
    for em_ref in (em_img_ref, em_pos_ref):
        for ch in range(0, CHANNEL, CH_CHUNK):
            blk = em_ref[pl.ds(ch, CH_CHUNK), :]                   # (8, npad)
            blk_s = blk if shift == 0 else pltpu.roll(blk, shift=shift, axis=1)
            p8 = p8 + blk * blk_s
    return jnp.sum(p8, axis=0, keepdims=True)                      # (1, npad)


def _ecrf_mp_kernel(em_img_ref, em_pos_ref, f_ref, wcomp_ref, out_ref,
                    *, Wp, npad, Cf):
    """Per-batch ECRF message passing + residual, flat lane-dense layout.

    em_img_ref : (CHANNEL, npad)  img_conv(resized img), zero-padded + flat
    em_pos_ref : (CHANNEL, npad)  pos_conv(position enc), zero-padded + flat
    f_ref      : (Cf, npad)       input feature, zero-padded + flat
    wcomp_ref  : (Cf,)            comp_conv weight (SMEM scalars)
    out_ref    : (Cf, npad)       inp + 0.2 * weighted_fea (garbage at halo /
                                  lane-pad positions; cropped in the wrapper)
    """
    f = f_ref[...]                                                 # (Cf, npad)

    # comp_conv (1x1, Cf -> 1) + sigmoid, once on the flat padded plane.
    cp = f[0:1, :] * wcomp_ref[0]
    for c in range(1, Cf):
        cp = cp + f[c:c + 1, :] * wcomp_ref[c]
    comp = jax.nn.sigmoid(cp)                                      # (1, npad)

    def contribute(acc, feat, shift):
        # acc += f_shifted * (comp_shifted * feat),  shift == (-o) % npad
        f_s = f if shift == 0 else pltpu.roll(f, shift=shift, axis=1)
        cp_s = comp if shift == 0 else pltpu.roll(comp, shift=shift, axis=1)
        return acc + f_s * (cp_s * feat)

    # Flat neighbour offsets o = (ky*DILATION - PAD)*Wp + (kx*DILATION - PAD).
    offsets = [(ky * DILATION - PAD) * Wp + (kx * DILATION - PAD)
               for ky in range(KERNEL_SIZE) for kx in range(KERNEL_SIZE)]
    pos_offsets = sorted(o for o in offsets if o > 0)
    assert sorted(-o for o in offsets if o < 0) == pos_offsets
    assert offsets.count(0) == 1

    acc = jnp.zeros((Cf, npad), jnp.float32)

    # Center tap (o == 0): feat = ||em||^2, no shifts.
    acc = contribute(acc, _shifted_em_dot(em_img_ref, em_pos_ref, 0, npad), 0)

    # Symmetric pairs (+o, -o): one shifted em-dot serves both neighbours,
    # since feat_{-o}[i] = g_o[i - o] (a cheap (1, npad) roll).
    for o in pos_offsets:
        s_pos = (-o) % npad          # reads flat index i + o
        s_neg = o                    # reads flat index i - o
        g = _shifted_em_dot(em_img_ref, em_pos_ref, s_pos, npad)
        acc = contribute(acc, g, s_pos)
        acc = contribute(acc, pltpu.roll(g, shift=s_neg, axis=1), s_neg)

    # MessagePass residual (if_sp == False): inp + 0.2 * weighted_fea.
    out_ref[...] = f + 0.2 * acc


def _position_encode(H, W, d_model):
    """PositionEncode.forward: (H, W, 2*d_model), x-channels first then y."""
    div_term = jnp.exp(jnp.arange(0, d_model, 2, dtype=jnp.float32)
                       * (-(math.log(10000.0) / d_model)))          # (d/2,)
    xs = jnp.arange(W, dtype=jnp.float32)[:, None] * div_term[None, :]
    ys = jnp.arange(H, dtype=jnp.float32)[:, None] * div_term[None, :]
    pe_x = jnp.stack([jnp.sin(xs), jnp.cos(xs)], axis=-1).reshape(W, d_model)
    pe_y = jnp.stack([jnp.sin(ys), jnp.cos(ys)], axis=-1).reshape(H, d_model)
    return jnp.concatenate(
        [jnp.broadcast_to(pe_x[None, :, :], (H, W, d_model)),
         jnp.broadcast_to(pe_y[:, None, :], (H, W, d_model))], axis=-1)


def _bilinear_resize_nchw(img, Ho, Wo):
    """F.interpolate(mode='bilinear', align_corners=False) for NCHW input."""
    _, _, Hi, Wi = img.shape

    def src_idx(out_size, in_size):
        scale = in_size / out_size
        s = (jnp.arange(out_size, dtype=jnp.float32) + 0.5) * scale - 0.5
        s = jnp.maximum(s, 0.0)
        i0 = jnp.minimum(jnp.floor(s).astype(jnp.int32), in_size - 1)
        i1 = jnp.minimum(i0 + 1, in_size - 1)
        w = jnp.clip(s - i0.astype(jnp.float32), 0.0, 1.0)
        return i0, i1, w

    y0, y1, wy = src_idx(Ho, Hi)
    x0, x1, wx = src_idx(Wo, Wi)
    wy = wy[None, None, :, None]
    wx = wx[None, None, None, :]
    g = lambda yi, xi: img[:, :, yi[:, None], xi[None, :]]
    return ((1 - wy) * (1 - wx) * g(y0, x0) + (1 - wy) * wx * g(y0, x1)
            + wy * (1 - wx) * g(y1, x0) + wy * wx * g(y1, x1))


@jax.jit
def message_pass(inp_nchw, img_nchw, wimg, wpos, wcomp):
    """MessagePass.forward (if_sp=False).  Inputs/outputs are NCHW."""
    B, Cf, H, W = inp_nchw.shape
    inp = inp_nchw.astype(jnp.float32)
    img = img_nchw.astype(jnp.float32)

    # Hoisted 1x1 convs (XLA): em_pos is batch-invariant (computed once),
    # em_img is a tiny K=3 conv better done outside the kernel.
    pos = _position_encode(H, W, D_MODEL)                            # (H,W,64)
    em_pos = jnp.einsum("hwc,cd->dhw", pos, wpos,
                        precision=jax.lax.Precision.HIGHEST)         # (32,H,W)
    img_r = _bilinear_resize_nchw(img, H, W)                         # (B,3,H,W)
    em_img = jnp.einsum("bchw,cd->bdhw", img_r, wimg,
                        precision=jax.lax.Precision.HIGHEST)         # (B,32,H,W)

    Hp, Wp = H + 2 * PAD, W + 2 * PAD
    npad = _round_up(Hp * Wp, 128)       # lane-dense flat spatial axis

    def flat_pad(x):
        # zero-pad spatially, flatten (Hp,Wp) -> Hp*Wp, zero-pad lanes to npad
        sp = [(0, 0)] * (x.ndim - 2) + [(PAD, PAD), (PAD, PAD)]
        xp = jnp.pad(x, sp)
        xp = xp.reshape(xp.shape[:-2] + (Hp * Wp,))
        tail = [(0, 0)] * (xp.ndim - 1) + [(0, npad - Hp * Wp)]
        return jnp.pad(xp, tail)

    em_img_f = flat_pad(em_img)          # (B, 32, npad)
    em_pos_f = flat_pad(em_pos)          # (32, npad)
    f_f = flat_pad(inp)                  # (B, Cf, npad)

    kernel = partial(_ecrf_mp_kernel, Wp=Wp, npad=npad, Cf=Cf)

    out_flat = pl.pallas_call(
        kernel,
        out_shape=jax.ShapeDtypeStruct((B, Cf, npad), jnp.float32),
        grid=(B,),
        in_specs=[
            pl.BlockSpec((None, CHANNEL, npad), lambda b: (b, 0, 0)),
            pl.BlockSpec((CHANNEL, npad), lambda b: (0, 0)),
            pl.BlockSpec((None, Cf, npad), lambda b: (b, 0, 0)),
            pl.BlockSpec(memory_space=pltpu.MemorySpace.SMEM),
        ],
        out_specs=pl.BlockSpec((None, Cf, npad), lambda b: (b, 0, 0)),
        compiler_params=pltpu.CompilerParams(
            dimension_semantics=("parallel",),
            vmem_limit_bytes=_vmem_limit_bytes()),
    )(em_img_f, em_pos_f, f_f, wcomp.reshape(-1))

    # Crop the lane-pad tail and the halo (garbage there), back to NCHW.
    out = out_flat[:, :, :Hp * Wp].reshape(B, Cf, Hp, Wp)
    return out[:, :, PAD:PAD + H, PAD:PAD + W]


def _reference(inp, img, wimg, wpos, wcomp):
    """Pure-JAX (XLA) reimplementation of MessagePass.forward (if_sp=False)."""
    inp = inp.astype(jnp.float32)
    B, Cf, H, W = inp.shape
    pos = _position_encode(H, W, D_MODEL)
    em_pos = jnp.einsum("hwc,cd->dhw", pos, wpos,
                        precision=jax.lax.Precision.HIGHEST)
    img_r = _bilinear_resize_nchw(img.astype(jnp.float32), H, W)
    em_img = jnp.einsum("bchw,cd->bdhw", img_r, wimg,
                        precision=jax.lax.Precision.HIGHEST)
    em = jnp.concatenate(
        [em_img, jnp.broadcast_to(em_pos[None], (B,) + em_pos.shape)], axis=1)
    pad = ((0, 0), (0, 0), (PAD, PAD), (PAD, PAD))
    em_p = jnp.pad(em, pad)
    f_p = jnp.pad(inp, pad)
    wc = wcomp.reshape(-1)
    comp_p = jax.nn.sigmoid(jnp.sum(f_p * wc[None, :, None, None], axis=1))
    acc = jnp.zeros_like(inp)
    for ky in range(KERNEL_SIZE):
        for kx in range(KERNEL_SIZE):
            dy, dx = ky * DILATION, kx * DILATION
            em_s = em_p[:, :, dy:dy + H, dx:dx + W]
            f_s = f_p[:, :, dy:dy + H, dx:dx + W]
            cp_s = comp_p[:, dy:dy + H, dx:dx + W]
            feat = jnp.sum(em_s * em, axis=1)
            acc = acc + f_s * (cp_s * feat)[:, None]
    return inp + 0.2 * acc


if __name__ == "__main__":
    key = jax.random.PRNGKey(0)
    k_inp, k_img, k_wi, k_wp, k_wc = jax.random.split(key, 5)

    B, Cf, H, W = 2, 4, 16, 16      # feature map; comp_channel = 4
    Hi, Wi = 32, 32                 # raw image, bilinearly resized to (H, W)

    inp = jax.random.normal(k_inp, (B, Cf, H, W), jnp.float32)
    img = jax.random.normal(k_img, (B, 3, Hi, Wi), jnp.float32)

    # Deterministic 1x1-conv weights, stored as (in_channels, out_channels).
    wimg = jax.random.normal(k_wi, (3, CHANNEL), jnp.float32) / math.sqrt(3.0)
    wpos = jax.random.normal(k_wp, (2 * D_MODEL, CHANNEL),
                             jnp.float32) / math.sqrt(2 * D_MODEL)
    wcomp = jax.random.normal(k_wc, (Cf,), jnp.float32) / math.sqrt(Cf)

    out = message_pass(inp, img, wimg, wpos, wcomp)
    out = jax.block_until_ready(out)
    assert out.shape == (B, Cf, H, W)
    assert bool(jnp.all(jnp.isfinite(out)))

    ref = _reference(inp, img, wimg, wpos, wcomp)
    err = float(jnp.max(jnp.abs(out - ref)))
    assert err < 1e-3, f"max abs error vs reference: {err}"
    print("KERNEL_OK")
</pallas_src>

<mosaic_0001>
module attributes {stable_mosaic.version = 11 : i64} {
  func.func @_ecrf_mp_kernel(%arg0: i32, %arg1: memref<1x32x512xf32, #tpu.memory_space<vmem>>, %arg2: memref<32x512xf32, #tpu.memory_space<vmem>>, %arg3: memref<1x4x512xf32, #tpu.memory_space<vmem>>, %arg4: memref<4xf32, #tpu.memory_space<smem>>, %arg5: memref<1x4x512xf32, #tpu.memory_space<vmem>>) attributes {dimension_semantics = [#tpu.dimension_semantics<parallel>], iteration_bounds = array<i64: 2>, scalar_prefetch = 0 : i64, scratch_operands = 0 : i64, tpu.core_type = #tpu.core_type<tc>, window_params = [{transform_indices = @transform_0, window_bounds = array<i64: 1, 32, 512>}, {pipeline_mode = #tpu.pipeline_mode<synchronous>, transform_indices = @transform_1, window_bounds = array<i64: 32, 512>}, {transform_indices = @transform_2, window_bounds = array<i64: 1, 4, 512>}, {transform_indices = @transform_3, window_bounds = array<i64: 4>}, {transform_indices = @transform_4, window_bounds = array<i64: 1, 4, 512>}]} {
    %c0 = arith.constant 0 : index
    %c0_0 = arith.constant 0 : index
    %c0_1 = arith.constant 0 : index
    %0 = vector.load %arg3[%c0, %c0_0, %c0_1] : memref<1x4x512xf32, #tpu.memory_space<vmem>>, vector<1x4x512xf32>
    %1 = vector.shape_cast %0 : vector<1x4x512xf32> to vector<4x512xf32>
    %2 = vector.extract_strided_slice %1 {offsets = [0, 0], sizes = [1, 512], strides = [1, 1]} : vector<4x512xf32> to vector<1x512xf32>
    %c0_2 = arith.constant 0 : index
    %3 = memref.load %arg4[%c0_2] : memref<4xf32, #tpu.memory_space<smem>>
    %4 = vector.broadcast %3 : f32 to vector<1x512xf32>
    %5 = arith.mulf %2, %4 : vector<1x512xf32>
    %6 = vector.extract_strided_slice %1 {offsets = [1, 0], sizes = [1, 512], strides = [1, 1]} : vector<4x512xf32> to vector<1x512xf32>
    %c1 = arith.constant 1 : index
    %7 = memref.load %arg4[%c1] : memref<4xf32, #tpu.memory_space<smem>>
    %8 = vector.broadcast %7 : f32 to vector<1x512xf32>
    %9 = arith.mulf %6, %8 : vector<1x512xf32>
    %10 = arith.addf %5, %9 : vector<1x512xf32>
    %11 = vector.extract_strided_slice %1 {offsets = [2, 0], sizes = [1, 512], strides = [1, 1]} : vector<4x512xf32> to vector<1x512xf32>
    %c2 = arith.constant 2 : index
    %12 = memref.load %arg4[%c2] : memref<4xf32, #tpu.memory_space<smem>>
    %13 = vector.broadcast %12 : f32 to vector<1x512xf32>
    %14 = arith.mulf %11, %13 : vector<1x512xf32>
    %15 = arith.addf %10, %14 : vector<1x512xf32>
    %16 = vector.extract_strided_slice %1 {offsets = [3, 0], sizes = [1, 512], strides = [1, 1]} : vector<4x512xf32> to vector<1x512xf32>
    %c3 = arith.constant 3 : index
    %17 = memref.load %arg4[%c3] : memref<4xf32, #tpu.memory_space<smem>>
    %18 = vector.broadcast %17 : f32 to vector<1x512xf32>
    %19 = arith.mulf %16, %18 : vector<1x512xf32>
    %20 = arith.addf %15, %19 : vector<1x512xf32>
    %21 = arith.negf %20 : vector<1x512xf32>
    %22 = math.exp %21 : vector<1x512xf32>
    %cst = arith.constant 1.000000e+00 : f32
    %23 = vector.broadcast %cst : f32 to vector<1x512xf32>
    %24 = arith.addf %23, %22 : vector<1x512xf32>
    %25 = arith.divf %23, %24 : vector<1x512xf32>
    %cst_3 = arith.constant 0.000000e+00 : f32
    %26 = vector.broadcast %cst_3 : f32 to vector<4x512xf32>
    %cst_4 = arith.constant 0.000000e+00 : f32
    %27 = vector.broadcast %cst_4 : f32 to vector<8x512xf32>
    %c0_5 = arith.constant 0 : index
    %c0_6 = arith.constant 0 : index
    %c0_7 = arith.constant 0 : index
    %28 = vector.load %arg1[%c0_5, %c0_6, %c0_7] : memref<1x32x512xf32, #tpu.memory_space<vmem>>, vector<1x8x512xf32>
    %29 = vector.shape_cast %28 : vector<1x8x512xf32> to vector<8x512xf32>
    %30 = arith.mulf %29, %29 : vector<8x512xf32>
    %31 = arith.addf %27, %30 : vector<8x512xf32>
    %c0_8 = arith.constant 0 : index
    %c8 = arith.constant 8 : index
    %c0_9 = arith.constant 0 : index
    %32 = vector.load %arg1[%c0_8, %c8, %c0_9] : memref<1x32x512xf32, #tpu.memory_space<vmem>>, vector<1x8x512xf32>
    %33 = vector.shape_cast %32 : vector<1x8x512xf32> to vector<8x512xf32>
    %34 = arith.mulf %33, %33 : vector<8x512xf32>
    %35 = arith.addf %31, %34 : vector<8x512xf32>
    %c0_10 = arith.constant 0 : index
    %c16 = arith.constant 16 : index
    %c0_11 = arith.constant 0 : index
    %36 = vector.load %arg1[%c0_10, %c16, %c0_11] : memref<1x32x512xf32, #tpu.memory_space<vmem>>, vector<1x8x512xf32>
    %37 = vector.shape_cast %36 : vector<1x8x512xf32> to vector<8x512xf32>
    %38 = arith.mulf %37, %37 : vector<8x512xf32>
    %39 = arith.addf %35, %38 : vector<8x512xf32>
    %c0_12 = arith.constant 0 : index
    %c24 = arith.constant 24 : index
    %c0_13 = arith.constant 0 : index
    %40 = vector.load %arg1[%c0_12, %c24, %c0_13] : memref<1x32x512xf32, #tpu.memory_space<vmem>>, vector<1x8x512xf32>
    %41 = vector.shape_cast %40 : vector<1x8x512xf32> to vector<8x512xf32>
    %42 = arith.mulf %41, %41 : vector<8x512xf32>
    %43 = arith.addf %39, %42 : vector<8x512xf32>
    %c0_14 = arith.constant 0 : index
    %c0_15 = arith.constant 0 : index
    %44 = vector.load %arg2[%c0_14, %c0_15] : memref<32x512xf32, #tpu.memory_space<vmem>>, vector<8x512xf32>
    %45 = arith.mulf %44, %44 : vector<8x512xf32>
    %46 = arith.addf %43, %45 : vector<8x512xf32>
    %c8_16 = arith.constant 8 : index
    %c0_17 = arith.constant 0 : index
    %47 = vector.load %arg2[%c8_16, %c0_17] : memref<32x512xf32, #tpu.memory_space<vmem>>, vector<8x512xf32>
    %48 = arith.mulf %47, %47 : vector<8x512xf32>
    %49 = arith.addf %46, %48 : vector<8x512xf32>
    %c16_18 = arith.constant 16 : index
    %c0_19 = arith.constant 0 : index
    %50 = vector.load %arg2[%c16_18, %c0_19] : memref<32x512xf32, #tpu.memory_space<vmem>>, vector<8x512xf32>
    %51 = arith.mulf %50, %50 : vector<8x512xf32>
    %52 = arith.addf %49, %51 : vector<8x512xf32>
    %c24_20 = arith.constant 24 : index
    %c0_21 = arith.constant 0 : index
    %53 = vector.load %arg2[%c24_20, %c0_21] : memref<32x512xf32, #tpu.memory_space<vmem>>, vector<8x512xf32>
    %54 = arith.mulf %53, %53 : vector<8x512xf32>
    %55 = arith.addf %52, %54 : vector<8x512xf32>
    %cst_22 = arith.constant dense<0.000000e+00> : vector<512xf32>
    %56 = vector.multi_reduction <add>, %55, %cst_22 [0] : vector<8x512xf32> to vector<512xf32>
    %57 = vector.shape_cast %56 : vector<512xf32> to vector<1x512xf32>
    %58 = arith.mulf %25, %57 : vector<1x512xf32>
    %59 = vector.broadcast %58 : vector<1x512xf32> to vector<4x512xf32>
    %60 = arith.mulf %1, %59 : vector<4x512xf32>
    %61 = arith.addf %26, %60 : vector<4x512xf32>
    %cst_23 = arith.constant 0.000000e+00 : f32
    %62 = vector.broadcast %cst_23 : f32 to vector<8x512xf32>
    %c0_24 = arith.constant 0 : index
    %c0_25 = arith.constant 0 : index
    %c0_26 = arith.constant 0 : index
    %63 = vector.load %arg1[%c0_24, %c0_25, %c0_26] : memref<1x32x512xf32, #tpu.memory_space<vmem>>, vector<1x8x512xf32>
    %64 = vector.shape_cast %63 : vector<1x8x512xf32> to vector<8x512xf32>
    %c510_i32 = arith.constant 510 : i32
    %65 = tpu.dynamic_rotate %64 by %c510_i32 dim 1 : vector<8x512xf32>, i32 -> vector<8x512xf32>
    %66 = arith.mulf %64, %65 : vector<8x512xf32>
    %67 = arith.addf %62, %66 : vector<8x512xf32>
    %c0_27 = arith.constant 0 : index
    %c8_28 = arith.constant 8 : index
    %c0_29 = arith.constant 0 : index
    %68 = vector.load %arg1[%c0_27, %c8_28, %c0_29] : memref<1x32x512xf32, #tpu.memory_space<vmem>>, vector<1x8x512xf32>
    %69 = vector.shape_cast %68 : vector<1x8x512xf32> to vector<8x512xf32>
    %c510_i32_30 = arith.constant 510 : i32
    %70 = tpu.dynamic_rotate %69 by %c510_i32_30 dim 1 : vector<8x512xf32>, i32 -> vector<8x512xf32>
    %71 = arith.mulf %69, %70 : vector<8x512xf32>
    %72 = arith.addf %67, %71 : vector<8x512xf32>
    %c0_31 = arith.constant 0 : index
    %c16_32 = arith.constant 16 : index
    %c0_33 = arith.constant 0 : index
    %73 = vector.load %arg1[%c0_31, %c16_32, %c0_33] : memref<1x32x512xf32, #tpu.memory_space<vmem>>, vector<1x8x512xf32>
    %74 = vector.shape_cast %73 : vector<1x8x512xf32> to vector<8x512xf32>
    %c510_i32_34 = arith.constant 510 : i32
    %75 = tpu.dynamic_rotate %74 by %c510_i32_34 dim 1 : vector<8x512xf32>, i32 -> vector<8x512xf32>
    %76 = arith.mulf %74, %75 : vector<8x512xf32>
    %77 = arith.addf %72, %76 : vector<8x512xf32>
    %c0_35 = arith.constant 0 : index
    %c24_36 = arith.constant 24 : index
    %c0_37 = arith.constant 0 : index
    %78 = vector.load %arg1[%c0_35, %c24_36, %c0_37] : memref<1x32x512xf32, #tpu.memory_space<vmem>>, vector<1x8x512xf32>
    %79 = vector.shape_cast %78 : vector<1x8x512xf32> to vector<8x512xf32>
    %c510_i32_38 = arith.constant 510 : i32
    %80 = tpu.dynamic_rotate %79 by %c510_i32_38 dim 1 : vector<8x512xf32>, i32 -> vector<8x512xf32>
    %81 = arith.mulf %79, %80 : vector<8x512xf32>
    %82 = arith.addf %77, %81 : vector<8x512xf32>
    %c0_39 = arith.constant 0 : index
    %c0_40 = arith.constant 0 : index
    %83 = vector.load %arg2[%c0_39, %c0_40] : memref<32x512xf32, #tpu.memory_space<vmem>>, vector<8x512xf32>
    %c510_i32_41 = arith.constant 510 : i32
    %84 = tpu.dynamic_rotate %83 by %c510_i32_41 dim 1 : vector<8x512xf32>, i32 -> vector<8x512xf32>
    %85 = arith.mulf %83, %84 : vector<8x512xf32>
    %86 = arith.addf %82, %85 : vector<8x512xf32>
    %c8_42 = arith.constant 8 : index
    %c0_43 = arith.constant 0 : index
    %87 = vector.load %arg2[%c8_42, %c0_43] : memref<32x512xf32, #tpu.memory_space<vmem>>, vector<8x512xf32>
    %c510_i32_44 = arith.constant 510 : i32
    %88 = tpu.dynamic_rotate %87 by %c510_i32_44 dim 1 : vector<8x512xf32>, i32 -> vector<8x512xf32>
    %89 = arith.mulf %87, %88 : vector<8x512xf32>
    %90 = arith.addf %86, %89 : vector<8x512xf32>
    %c16_45 = arith.constant 16 : index
    %c0_46 = arith.constant 0 : index
    %91 = vector.load %arg2[%c16_45, %c0_46] : memref<32x512xf32, #tpu.memory_space<vmem>>, vector<8x512xf32>
    %c510_i32_47 = arith.constant 510 : i32
    %92 = tpu.dynamic_rotate %91 by %c510_i32_47 dim 1 : vector<8x512xf32>, i32 -> vector<8x512xf32>
    %93 = arith.mulf %91, %92 : vector<8x512xf32>
    %94 = arith.addf %90, %93 : vector<8x512xf32>
    %c24_48 = arith.constant 24 : index
    %c0_49 = arith.constant 0 : index
    %95 = vector.load %arg2[%c24_48, %c0_49] : memref<32x512xf32, #tpu.memory_space<vmem>>, vector<8x512xf32>
    %c510_i32_50 = arith.constant 510 : i32
    %96 = tpu.dynamic_rotate %95 by %c510_i32_50 dim 1 : vector<8x512xf32>, i32 -> vector<8x512xf32>
    %97 = arith.mulf %95, %96 : vector<8x512xf32>
    %98 = arith.addf %94, %97 : vector<8x512xf32>
    %cst_51 = arith.constant dense<0.000000e+00> : vector<512xf32>
    %99 = vector.multi_reduction <add>, %98, %cst_51 [0] : vector<8x512xf32> to vector<512xf32>
    %100 = vector.shape_cast %99 : vector<512xf32> to vector<1x512xf32>
    %c510_i32_52 = arith.constant 510 : i32
    %101 = tpu.dynamic_rotate %1 by %c510_i32_52 dim 1 : vector<4x512xf32>, i32 -> vector<4x512xf32>
    %c510_i32_53 = arith.constant 510 : i32
    %102 = tpu.dynamic_rotate %25 by %c510_i32_53 dim 1 : vector<1x512xf32>, i32 -> vector<1x512xf32>
    %103 = arith.mulf %102, %100 : vector<1x512xf32>
    %104 = vector.broadcast %103 : vector<1x512xf32> to vector<4x512xf32>
    %105 = arith.mulf %101, %104 : vector<4x512xf32>
    %106 = arith.addf %61, %105 : vector<4x512xf32>
    %c2_i32 = arith.constant 2 : i32
    %107 = tpu.dynamic_rotate %100 by %c2_i32 dim 1 : vector<1x512xf32>, i32 -> vector<1x512xf32>
    %c2_i32_54 = arith.constant 2 : i32
    %108 = tpu.dynamic_rotate %1 by %c2_i32_54 dim 1 : vector<4x512xf32>, i32 -> vector<4x512xf32>
    %c2_i32_55 = arith.constant 2 : i32
    %109 = tpu.dynamic_rotate %25 by %c2_i32_55 dim 1 : vector<1x512xf32>, i32 -> vector<1x512xf32>
    %110 = arith.mulf %109, %107 : vector<1x512xf32>
    %111 = vector.broadcast %110 : vector<1x512xf32> to vector<4x512xf32>
    %112 = arith.mulf %108, %111 : vector<4x512xf32>
    %113 = arith.addf %106, %112 : vector<4x512xf32>
    %cst_56 = arith.constant 0.000000e+00 : f32
    %114 = vector.broadcast %cst_56 : f32 to vector<8x512xf32>
    %c0_57 = arith.constant 0 : index
    %c0_58 = arith.constant 0 : index
    %c0_59 = arith.constant 0 : index
    %115 = vector.load %arg1[%c0_57, %c0_58, %c0_59] : memref<1x32x512xf32, #tpu.memory_space<vmem>>, vector<1x8x512xf32>
    %116 = vector.shape_cast %115 : vector<1x8x512xf32> to vector<8x512xf32>
    %c474_i32 = arith.constant 474 : i32
    %117 = tpu.dynamic_rotate %116 by %c474_i32 dim 1 : vector<8x512xf32>, i32 -> vector<8x512xf32>
    %118 = arith.mulf %116, %117 : vector<8x512xf32>
    %119 = arith.addf %114, %118 : vector<8x512xf32>
    %c0_60 = arith.constant 0 : index
    %c8_61 = arith.constant 8 : index
    %c0_62 = arith.constant 0 : index
    %120 = vector.load %arg1[%c0_60, %c8_61, %c0_62] : memref<1x32x512xf32, #tpu.memory_space<vmem>>, vector<1x8x512xf32>
    %121 = vector.shape_cast %120 : vector<1x8x512xf32> to vector<8x512xf32>
    %c474_i32_63 = arith.constant 474 : i32
    %122 = tpu.dynamic_rotate %121 by %c474_i32_63 dim 1 : vector<8x512xf32>, i32 -> vector<8x512xf32>
    %123 = arith.mulf %121, %122 : vector<8x512xf32>
    %124 = arith.addf %119, %123 : vector<8x512xf32>
    %c0_64 = arith.constant 0 : index
    %c16_65 = arith.constant 16 : index
    %c0_66 = arith.constant 0 : index
    %125 = vector.load %arg1[%c0_64, %c16_65, %c0_66] : memref<1x32x512xf32, #tpu.memory_space<vmem>>, vector<1x8x512xf32>
    %126 = vector.shape_cast %125 : vector<1x8x512xf32> to vector<8x512xf32>
    %c474_i32_67 = arith.constant 474 : i32
    %127 = tpu.dynamic_rotate %126 by %c474_i32_67 dim 1 : vector<8x512xf32>, i32 -> vector<8x512xf32>
    %128 = arith.mulf %126, %127 : vector<8x512xf32>
    %129 = arith.addf %124, %128 : vector<8x512xf32>
    %c0_68 = arith.constant 0 : index
    %c24_69 = arith.constant 24 : index
    %c0_70 = arith.constant 0 : index
    %130 = vector.load %arg1[%c0_68, %c24_69, %c0_70] : memref<1x32x512xf32, #tpu.memory_space<vmem>>, vector<1x8x512xf32>
    %131 = vector.shape_cast %130 : vector<1x8x512xf32> to vector<8x512xf32>
    %c474_i32_71 = arith.constant 474 : i32
    %132 = tpu.dynamic_rotate %131 by %c474_i32_71 dim 1 : vector<8x512xf32>, i32 -> vector<8x512xf32>
    %133 = arith.mulf %131, %132 : vector<8x512xf32>
    %134 = arith.addf %129, %133 : vector<8x512xf32>
    %c0_72 = arith.constant 0 : index
    %c0_73 = arith.constant 0 : index
    %135 = vector.load %arg2[%c0_72, %c0_73] : memref<32x512xf32, #tpu.memory_space<vmem>>, vector<8x512xf32>
    %c474_i32_74 = arith.constant 474 : i32
    %136 = tpu.dynamic_rotate %135 by %c474_i32_74 dim 1 : vector<8x512xf32>, i32 -> vector<8x512xf32>
    %137 = arith.mulf %135, %136 : vector<8x512xf32>
    %138 = arith.addf %134, %137 : vector<8x512xf32>
    %c8_75 = arith.constant 8 : index
    %c0_76 = arith.constant 0 : index
    %139 = vector.load %arg2[%c8_75, %c0_76] : memref<32x512xf32, #tpu.memory_space<vmem>>, vector<8x512xf32>
    %c474_i32_77 = arith.constant 474 : i32
    %140 = tpu.dynamic_rotate %139 by %c474_i32_77 dim 1 : vector<8x512xf32>, i32 -> vector<8x512xf32>
    %141 = arith.mulf %139, %140 : vector<8x512xf32>
    %142 = arith.addf %138, %141 : vector<8x512xf32>
    %c16_78 = arith.constant 16 : index
    %c0_79 = arith.constant 0 : index
    %143 = vector.load %arg2[%c16_78, %c0_79] : memref<32x512xf32, #tpu.memory_space<vmem>>, vector<8x512xf32>
    %c474_i32_80 = arith.constant 474 : i32
    %144 = tpu.dynamic_rotate %143 by %c474_i32_80 dim 1 : vector<8x512xf32>, i32 -> vector<8x512xf32>
    %145 = arith.mulf %143, %144 : vector<8x512xf32>
    %146 = arith.addf %142, %145 : vector<8x512xf32>
    %c24_81 = arith.constant 24 : index
    %c0_82 = arith.constant 0 : index
    %147 = vector.load %arg2[%c24_81, %c0_82] : memref<32x512xf32, #tpu.memory_space<vmem>>, vector<8x512xf32>
    %c474_i32_83 = arith.constant 474 : i32
    %148 = tpu.dynamic_rotate %147 by %c474_i32_83 dim 1 : vector<8x512xf32>, i32 -> vector<8x512xf32>
    %149 = arith.mulf %147, %148 : vector<8x512xf32>
    %150 = arith.addf %146, %149 : vector<8x512xf32>
    %cst_84 = arith.constant dense<0.000000e+00> : vector<512xf32>
    %151 = vector.multi_reduction <add>, %150, %cst_84 [0] : vector<8x512xf32> to vector<512xf32>
    %152 = vector.shape_cast %151 : vector<512xf32> to vector<1x512xf32>
    %c474_i32_85 = arith.constant 474 : i32
    %153 = tpu.dynamic_rotate %1 by %c474_i32_85 dim 1 : vector<4x512xf32>, i32 -> vector<4x512xf32>
    %c474_i32_86 = arith.constant 474 : i32
    %154 = tpu.dynamic_rotate %25 by %c474_i32_86 dim 1 : vector<1x512xf32>, i32 -> vector<1x512xf32>
    %155 = arith.mulf %154, %152 : vector<1x512xf32>
    %156 = vector.broadcast %155 : vector<1x512xf32> to vector<4x512xf32>
    %157 = arith.mulf %153, %156 : vector<4x512xf32>
    %158 = arith.addf %113, %157 : vector<4x512xf32>
    %c38_i32 = arith.constant 38 : i32
    %159 = tpu.dynamic_rotate %152 by %c38_i32 dim 1 : vector<1x512xf32>, i32 -> vector<1x512xf32>
    %c38_i32_87 = arith.constant 38 : i32
    %160 = tpu.dynamic_rotate %1 by %c38_i32_87 dim 1 : vector<4x512xf32>, i32 -> vector<4x512xf32>
    %c38_i32_88 = arith.constant 38 : i32
    %161 = tpu.dynamic_rotate %25 by %c38_i32_88 dim 1 : vector<1x512xf32>, i32 -> vector<1x512xf32>
    %162 = arith.mulf %161, %159 : vector<1x512xf32>
    %163 = vector.broadcast %162 : vector<1x512xf32> to vector<4x512xf32>
    %164 = arith.mulf %160, %163 : vector<4x512xf32>
    %165 = arith.addf %158, %164 : vector<4x512xf32>
    %cst_89 = arith.constant 0.000000e+00 : f32
    %166 = vector.broadcast %cst_89 : f32 to vector<8x512xf32>
    %c0_90 = arith.constant 0 : index
    %c0_91 = arith.constant 0 : index
    %c0_92 = arith.constant 0 : index
    %167 = vector.load %arg1[%c0_90, %c0_91, %c0_92] : memref<1x32x512xf32, #tpu.memory_space<vmem>>, vector<1x8x512xf32>
    %168 = vector.shape_cast %167 : vector<1x8x512xf32> to vector<8x512xf32>
    %c472_i32 = arith.constant 472 : i32
    %169 = tpu.dynamic_rotate %168 by %c472_i32 dim 1 : vector<8x512xf32>, i32 -> vector<8x512xf32>
    %170 = arith.mulf %168, %169 : vector<8x512xf32>
    %171 = arith.addf %166, %170 : vector<8x512xf32>
    %c0_93 = arith.constant 0 : index
    %c8_94 = arith.constant 8 : index
    %c0_95 = arith.constant 0 : index
    %172 = vector.load %arg1[%c0_93, %c8_94, %c0_95] : memref<1x32x512xf32, #tpu.memory_space<vmem>>, vector<1x8x512xf32>
    %173 = vector.shape_cast %172 : vector<1x8x512xf32> to vector<8x512xf32>
    %c472_i32_96 = arith.constant 472 : i32
    %174 = tpu.dynamic_rotate %173 by %c472_i32_96 dim 1 : vector<8x512xf32>, i32 -> vector<8x512xf32>
    %175 = arith.mulf %173, %174 : vector<8x512xf32>
    %176 = arith.addf %171, %175 : vector<8x512xf32>
    %c0_97 = arith.constant 0 : index
    %c16_98 = arith.constant 16 : index
    %c0_99 = arith.constant 0 : index
    %177 = vector.load %arg1[%c0_97, %c16_98, %c0_99] : memref<1x32x512xf32, #tpu.memory_space<vmem>>, vector<1x8x512xf32>
    %178 = vector.shape_cast %177 : vector<1x8x512xf32> to vector<8x512xf32>
    %c472_i32_100 = arith.constant 472 : i32
    %179 = tpu.dynamic_rotate %178 by %c472_i32_100 dim 1 : vector<8x512xf32>, i32 -> vector<8x512xf32>
    %180 = arith.mulf %178, %179 : vector<8x512xf32>
    %181 = arith.addf %176, %180 : vector<8x512xf32>
    %c0_101 = arith.constant 0 : index
    %c24_102 = arith.constant 24 : index
    %c0_103 = arith.constant 0 : index
    %182 = vector.load %arg1[%c0_101, %c24_102, %c0_103] : memref<1x32x512xf32, #tpu.memory_space<vmem>>, vector<1x8x512xf32>
    %183 = vector.shape_cast %182 : vector<1x8x512xf32> to vector<8x512xf32>
    %c472_i32_104 = arith.constant 472 : i32
    %184 = tpu.dynamic_rotate %183 by %c472_i32_104 dim 1 : vector<8x512xf32>, i32 -> vector<8x512xf32>
    %185 = arith.mulf %183, %184 : vector<8x512xf32>
    %186 = arith.addf %181, %185 : vector<8x512xf32>
    %c0_105 = arith.constant 0 : index
    %c0_106 = arith.constant 0 : index
    %187 = vector.load %arg2[%c0_105, %c0_106] : memref<32x512xf32, #tpu.memory_space<vmem>>, vector<8x512xf32>
    %c472_i32_107 = arith.constant 472 : i32
    %188 = tpu.dynamic_rotate %187 by %c472_i32_107 dim 1 : vector<8x512xf32>, i32 -> vector<8x512xf32>
    %189 = arith.mulf %187, %188 : vector<8x512xf32>
    %190 = arith.addf %186, %189 : vector<8x512xf32>
    %c8_108 = arith.constant 8 : index
    %c0_109 = arith.constant 0 : index
    %191 = vector.load %arg2[%c8_108, %c0_109] : memref<32x512xf32, #tpu.memory_space<vmem>>, vector<8x512xf32>
    %c472_i32_110 = arith.constant 472 : i32
    %192 = tpu.dynamic_rotate %191 by %c472_i32_110 dim 1 : vector<8x512xf32>, i32 -> vector<8x512xf32>
    %193 = arith.mulf %191, %192 : vector<8x512xf32>
    %194 = arith.addf %190, %193 : vector<8x512xf32>
    %c16_111 = arith.constant 16 : index
    %c0_112 = arith.constant 0 : index
    %195 = vector.load %arg2[%c16_111, %c0_112] : memref<32x512xf32, #tpu.memory_space<vmem>>, vector<8x512xf32>
    %c472_i32_113 = arith.constant 472 : i32
    %196 = tpu.dynamic_rotate %195 by %c472_i32_113 dim 1 : vector<8x512xf32>, i32 -> vector<8x512xf32>
    %197 = arith.mulf %195, %196 : vector<8x512xf32>
    %198 = arith.addf %194, %197 : vector<8x512xf32>
    %c24_114 = arith.constant 24 : index
    %c0_115 = arith.constant 0 : index
    %199 = vector.load %arg2[%c24_114, %c0_115] : memref<32x512xf32, #tpu.memory_space<vmem>>, vector<8x512xf32>
    %c472_i32_116 = arith.constant 472 : i32
    %200 = tpu.dynamic_rotate %199 by %c472_i32_116 dim 1 : vector<8x512xf32>, i32 -> vector<8x512xf32>
    %201 = arith.mulf %199, %200 : vector<8x512xf32>
    %202 = arith.addf %198, %201 : vector<8x512xf32>
    %cst_117 = arith.constant dense<0.000000e+00> : vector<512xf32>
    %203 = vector.multi_reduction <add>, %202, %cst_117 [0] : vector<8x512xf32> to vector<512xf32>
    %204 = vector.shape_cast %203 : vector<512xf32> to vector<1x512xf32>
    %c472_i32_118 = arith.constant 472 : i32
    %205 = tpu.dynamic_rotate %1 by %c472_i32_118 dim 1 : vector<4x512xf32>, i32 -> vector<4x512xf32>
    %c472_i32_119 = arith.constant 472 : i32
    %206 = tpu.dynamic_rotate %25 by %c472_i32_119 dim 1 : vector<1x512xf32>, i32 -> vector<1x512xf32>
    %207 = arith.mulf %206, %204 : vector<1x512xf32>
    %208 = vector.broadcast %207 : vector<1x512xf32> to vector<4x512xf32>
    %209 = arith.mulf %205, %208 : vector<4x512xf32>
    %210 = arith.addf %165, %209 : vector<4x512xf32>
    %c40_i32 = arith.constant 40 : i32
    %211 = tpu.dynamic_rotate %204 by %c40_i32 dim 1 : vector<1x512xf32>, i32 -> vector<1x512xf32>
    %c40_i32_120 = arith.constant 40 : i32
    %212 = tpu.dynamic_rotate %1 by %c40_i32_120 dim 1 : vector<4x512xf32>, i32 -> vector<4x512xf32>
    %c40_i32_121 = arith.constant 40 : i32
    %213 = tpu.dynamic_rotate %25 by %c40_i32_121 dim 1 : vector<1x512xf32>, i32 -> vector<1x512xf32>
    %214 = arith.mulf %213, %211 : vector<1x512xf32>
    %215 = vector.broadcast %214 : vector<1x512xf32> to vector<4x512xf32>
    %216 = arith.mulf %212, %215 : vector<4x512xf32>
    %217 = arith.addf %210, %216 : vector<4x512xf32>
    %cst_122 = arith.constant 0.000000e+00 : f32
    %218 = vector.broadcast %cst_122 : f32 to vector<8x512xf32>
    %c0_123 = arith.constant 0 : index
    %c0_124 = arith.constant 0 : index
    %c0_125 = arith.constant 0 : index
    %219 = vector.load %arg1[%c0_123, %c0_124, %c0_125] : memref<1x32x512xf32, #tpu.memory_space<vmem>>, vector<1x8x512xf32>
    %220 = vector.shape_cast %219 : vector<1x8x512xf32> to vector<8x512xf32>
    %c470_i32 = arith.constant 470 : i32
    %221 = tpu.dynamic_rotate %220 by %c470_i32 dim 1 : vector<8x512xf32>, i32 -> vector<8x512xf32>
    %222 = arith.mulf %220, %221 : vector<8x512xf32>
    %223 = arith.addf %218, %222 : vector<8x512xf32>
    %c0_126 = arith.constant 0 : index
    %c8_127 = arith.constant 8 : index
    %c0_128 = arith.constant 0 : index
    %224 = vector.load %arg1[%c0_126, %c8_127, %c0_128] : memref<1x32x512xf32, #tpu.memory_space<vmem>>, vector<1x8x512xf32>
    %225 = vector.shape_cast %224 : vector<1x8x512xf32> to vector<8x512xf32>
    %c470_i32_129 = arith.constant 470 : i32
    %226 = tpu.dynamic_rotate %225 by %c470_i32_129 dim 1 : vector<8x512xf32>, i32 -> vector<8x512xf32>
    %227 = arith.mulf %225, %226 : vector<8x512xf32>
    %228 = arith.addf %223, %227 : vector<8x512xf32>
    %c0_130 = arith.constant 0 : index
    %c16_131 = arith.constant 16 : index
    %c0_132 = arith.constant 0 : index
    %229 = vector.load %arg1[%c0_130, %c16_131, %c0_132] : memref<1x32x512xf32, #tpu.memory_space<vmem>>, vector<1x8x512xf32>
    %230 = vector.shape_cast %229 : vector<1x8x512xf32> to vector<8x512xf32>
    %c470_i32_133 = arith.constant 470 : i32
    %231 = tpu.dynamic_rotate %230 by %c470_i32_133 dim 1 : vector<8x512xf32>, i32 -> vector<8x512xf32>
    %232 = arith.mulf %230, %231 : vector<8x512xf32>
    %233 = arith.addf %228, %232 : vector<8x512xf32>
    %c0_134 = arith.constant 0 : index
    %c24_135 = arith.constant 24 : index
    %c0_136 = arith.constant 0 : index
    %234 = vector.load %arg1[%c0_134, %c24_135, %c0_136] : memref<1x32x512xf32, #tpu.memory_space<vmem>>, vector<1x8x512xf32>
    %235 = vector.shape_cast %234 : vector<1x8x512xf32> to vector<8x512xf32>
    %c470_i32_137 = arith.constant 470 : i32
    %236 = tpu.dynamic_rotate %235 by %c470_i32_137 dim 1 : vector<8x512xf32>, i32 -> vector<8x512xf32>
    %237 = arith.mulf %235, %236 : vector<8x512xf32>
    %238 = arith.addf %233, %237 : vector<8x512xf32>
    %c0_138 = arith.constant 0 : index
    %c0_139 = arith.constant 0 : index
    %239 = vector.load %arg2[%c0_138, %c0_139] : memref<32x512xf32, #tpu.memory_space<vmem>>, vector<8x512xf32>
    %c470_i32_140 = arith.constant 470 : i32
    %240 = tpu.dynamic_rotate %239 by %c470_i32_140 dim 1 : vector<8x512xf32>, i32 -> vector<8x512xf32>
    %241 = arith.mulf %239, %240 : vector<8x512xf32>
    %242 = arith.addf %238, %241 : vector<8x512xf32>
    %c8_141 = arith.constant 8 : index
    %c0_142 = arith.constant 0 : index
    %243 = vector.load %arg2[%c8_141, %c0_142] : memref<32x512xf32, #tpu.memory_space<vmem>>, vector<8x512xf32>
    %c470_i32_143 = arith.constant 470 : i32
    %244 = tpu.dynamic_rotate %243 by %c470_i32_143 dim 1 : vector<8x512xf32>, i32 -> vector<8x512xf32>
    %245 = arith.mulf %243, %244 : vector<8x512xf32>
    %246 = arith.addf %242, %245 : vector<8x512xf32>
    %c16_144 = arith.constant 16 : index
    %c0_145 = arith.constant 0 : index
    %247 = vector.load %arg2[%c16_144, %c0_145] : memref<32x512xf32, #tpu.memory_space<vmem>>, vector<8x512xf32>
    %c470_i32_146 = arith.constant 470 : i32
    %248 = tpu.dynamic_rotate %247 by %c470_i32_146 dim 1 : vector<8x512xf32>, i32 -> vector<8x512xf32>
    %249 = arith.mulf %247, %248 : vector<8x512xf32>
    %250 = arith.addf %246, %249 : vector<8x512xf32>
    %c24_147 = arith.constant 24 : index
    %c0_148 = arith.constant 0 : index
    %251 = vector.load %arg2[%c24_147, %c0_148] : memref<32x512xf32, #tpu.memory_space<vmem>>, vector<8x512xf32>
    %c470_i32_149 = arith.constant 470 : i32
    %252 = tpu.dynamic_rotate %251 by %c470_i32_149 dim 1 : vector<8x512xf32>, i32 -> vector<8x512xf32>
    %253 = arith.mulf %251, %252 : vector<8x512xf32>
    %254 = arith.addf %250, %253 : vector<8x512xf32>
    %cst_150 = arith.constant dense<0.000000e+00> : vector<512xf32>
    %255 = vector.multi_reduction <add>, %254, %cst_150 [0] : vector<8x512xf32> to vector<512xf32>
    %256 = vector.shape_cast %255 : vector<512xf32> to vector<1x512xf32>
    %c470_i32_151 = arith.constant 470 : i32
    %257 = tpu.dynamic_rotate %1 by %c470_i32_151 dim 1 : vector<4x512xf32>, i32 -> vector<4x512xf32>
    %c470_i32_152 = arith.constant 470 : i32
    %258 = tpu.dynamic_rotate %25 by %c470_i32_152 dim 1 : vector<1x512xf32>, i32 -> vector<1x512xf32>
    %259 = arith.mulf %258, %256 : vector<1x512xf32>
    %260 = vector.broadcast %259 : vector<1x512xf32> to vector<4x512xf32>
    %261 = arith.mulf %257, %260 : vector<4x512xf32>
    %262 = arith.addf %217, %261 : vector<4x512xf32>
    %c42_i32 = arith.constant 42 : i32
    %263 = tpu.dynamic_rotate %256 by %c42_i32 dim 1 : vector<1x512xf32>, i32 -> vector<1x512xf32>
    %c42_i32_153 = arith.constant 42 : i32
    %264 = tpu.dynamic_rotate %1 by %c42_i32_153 dim 1 : vector<4x512xf32>, i32 -> vector<4x512xf32>
    %c42_i32_154 = arith.constant 42 : i32
    %265 = tpu.dynamic_rotate %25 by %c42_i32_154 dim 1 : vector<1x512xf32>, i32 -> vector<1x512xf32>
    %266 = arith.mulf %265, %263 : vector<1x512xf32>
    %267 = vector.broadcast %266 : vector<1x512xf32> to vector<4x512xf32>
    %268 = arith.mulf %264, %267 : vector<4x512xf32>
    %269 = arith.addf %262, %268 : vector<4x512xf32>
    %cst_155 = arith.constant 2.000000e-01 : f32
    %270 = vector.broadcast %cst_155 : f32 to vector<4x512xf32>
    %271 = arith.mulf %270, %269 : vector<4x512xf32>
    %272 = arith.addf %1, %271 : vector<4x512xf32>
    %c0_156 = arith.constant 0 : index
    %c0_157 = arith.constant 0 : index
    %c0_158 = arith.constant 0 : index
    %273 = vector.load %arg5[%c0_156, %c0_157, %c0_158] : memref<1x4x512xf32, #tpu.memory_space<vmem>>, vector<1x4x512xf32>
    %274 = vector.shape_cast %273 : vector<1x4x512xf32> to vector<4x512xf32>
    %275 = vector.shape_cast %272 : vector<4x512xf32> to vector<1x4x512xf32>
    tpu.vector_store %arg5[%c0_156, %c0_157, %c0_158], %275 {strides = array<i32>} : memref<1x4x512xf32, #tpu.memory_space<vmem>>, vector<1x4x512xf32>,
    return
  }
  func.func @transform_0(%arg0: i32) -> (i32, i32, i32) {
    %c0_i32 = arith.constant 0 : i32
    %c0_i32_0 = arith.constant 0 : i32
    %c0_i32_1 = arith.constant 0 : i32
    return %arg0, %c0_i32, %c0_i32_0 : i32, i32, i32
  }
  func.func @transform_1(%arg0: i32) -> (i32, i32) {
    %c0_i32 = arith.constant 0 : i32
    %c0_i32_0 = arith.constant 0 : i32
    %c0_i32_1 = arith.constant 0 : i32
    return %c0_i32, %c0_i32_0 : i32, i32
  }
  func.func @transform_2(%arg0: i32) -> (i32, i32, i32) {
    %c0_i32 = arith.constant 0 : i32
    %c0_i32_0 = arith.constant 0 : i32
    %c0_i32_1 = arith.constant 0 : i32
    return %arg0, %c0_i32, %c0_i32_0 : i32, i32, i32
  }
  func.func @transform_3(%arg0: i32) -> i32 {
    %c0_i32 = arith.constant 0 : i32
    %c0_i32_0 = arith.constant 0 : i32
    return %c0_i32 : i32
  }
  func.func @transform_4(%arg0: i32) -> (i32, i32, i32) {
    %c0_i32 = arith.constant 0 : i32
    %c0_i32_0 = arith.constant 0 : i32
    %c0_i32_1 = arith.constant 0 : i32
    return %arg0, %c0_i32, %c0_i32_0 : i32, i32, i32
  }
}

</mosaic_0001>

<llo_original>
// kernel: message_pass.1
$region0: #{message_pass.1}
  #allocation0 [shape = 'u32[]', space=smem, size = 0x4, offset = 0x4, fixed_abs, tag = 'smem constant byte address 0x4 - core index']
  #allocation1 [shape = 'u32[144,128]{1,0:T(1,128)}', space=vmem, size = 0x12000, scoped, tag = 'internal scratch']
  %s0 = inlined_call_operand.vmem [shape: f32[2,32,512], index: 0, kind: input, shape index: {}]
  %s1 = inlined_call_operand.vmem [shape: f32[32,512], index: 1, kind: input, shape index: {}]
  %s2 = inlined_call_operand.vmem [shape: f32[2,4,512], index: 2, kind: input, shape index: {}]
  %s3 = inlined_call_operand.vmem [shape: f32[4], index: 3, kind: input, shape index: {}]
  %s4 = inlined_call_operand.vmem [shape: f32[2,4,512], index: 4, kind: output, shape index: {}]
  %s5 = sld [smem:[#allocation0]]
  $region53: #{message_pass.1} parent=0
    _
  %s7 = ssub.s32 1, %s5
  %s8 = scalar_select 0, %s7, %s5
  $region1: #{message_pass.1} parent=0
    #allocation2 [shape = 'u8[512]{0}', space=smem, size = 0x200, scoped, tag = 'input window, operand 3, single buffered']
    #allocation3 [shape = 's32[2]{0}', space=sflag, size = 0x8, scoped, tag = 'scoped memory for message_pass.1']
    %9 = vsyncpa [#allocation3], 0
    loop: start=0, step=1, limit=4
    $region2: #{message_pass.1} parent=1 // loop_pre_header
      _
    $region3: #{message_pass.1} parent=1 // loop_header
      %s11 = sphi 0, %s15
      %p12 = scmp.ge.s32.totalorder %s11, 4
      %s21 = sphi 0, %s23
      %s24 = sphi 0, %s21
      %s25 = sphi 0, %s24
      %s41 = sphi 0, %s25
      %s45 = sphi 0, %s45
      %s47 = sphi 0, %s45
      %s48 = sphi 0, %s47
      %s62 = sphi 0, %s48
      %s68 = sphi 0, %s70
      %s71 = sphi 0, %s68
      %s72 = sphi 0, %s71
      %s88 = sphi 0, %s72
      %s92 = sphi 0, %s92
      %s94 = sphi 0, %s92
      %s95 = sphi 0, %s94
      %s109 = sphi 0, %s95
      %s115 = sphi 0, %s117
      %s118 = sphi 0, %s115
      %s119 = sphi 0, %s118
      %s135 = sphi 0, %s119
    $region4: #{message_pass.1} parent=1 // loop_header_branch
      %14 = sbr.rel (%p12) target = $region8
    $region5: #{message_pass.1} parent=1 // loop_body
      %s16 = ssub.s32 %s11, 1
      %s17 = ssub.s32 %s11, 2
      %s18 = sadd.s32 %s11, 1
      %s19 = ssub.s32 %s11, %s18
      %p20 = scmp.eq.s32.totalorder %s19, 0
      %s22 = sadd.s32 %s21, 1
      %s23 = scalar_select %p20, %s21, %s22
      %p26 = pneg %p20
      %p27 = scmp.eq.s32.totalorder %s11, 1
      %p28 = por %p26, %p27
      %p29 = scmp.ne.s32.totalorder %s21, %s24
      %p30 = scmp.eq.s32.totalorder %s11, 0
      %p31 = por %p29, %p30
      %p32 = scmp.ne.s32.totalorder %s21, %s24
      %p33 = scmp.eq.s32.totalorder %s16, 1
      %p34 = por %p32, %p33
      %p35 = scmp.ne.s32.totalorder %s24, %s25
      %p36 = scmp.eq.s32.totalorder %s16, 0
      %p37 = por %p35, %p36
      %p38 = scmp.ne.s32.totalorder %s24, %s25
      %p39 = scmp.eq.s32.totalorder %s17, 1
      %p40 = por %p38, %p39
      %p42 = scmp.ne.s32.totalorder %s25, %s41
      %p43 = scmp.eq.s32.totalorder %s17, 0
      %p44 = por %p42, %p43
      %s46 = sadd.s32 %s45, 1
      %p49 = scmp.eq.s32.totalorder %s11, 1
      %p50 = scmp.ne.s32.totalorder %s45, %s47
      %p51 = scmp.eq.s32.totalorder %s11, 0
      %p52 = por %p50, %p51
      %p53 = scmp.ne.s32.totalorder %s45, %s47
      %p54 = scmp.eq.s32.totalorder %s16, 1
      %p55 = por %p53, %p54
      %p56 = scmp.ne.s32.totalorder %s47, %s48
      %p57 = scmp.eq.s32.totalorder %s16, 0
      %p58 = por %p56, %p57
      %p59 = scmp.ne.s32.totalorder %s47, %s48
      %p60 = scmp.eq.s32.totalorder %s17, 1
      %p61 = por %p59, %p60
      %p63 = scmp.ne.s32.totalorder %s48, %s62
      %p64 = scmp.eq.s32.totalorder %s17, 0
      %p65 = por %p63, %p64
      %s66 = ssub.s32 %s11, %s18
      %p67 = scmp.eq.s32.totalorder %s66, 0
      %s69 = sadd.s32 %s68, 1
      %s70 = scalar_select %p67, %s68, %s69
      %p73 = pneg %p67
      %p74 = scmp.eq.s32.totalorder %s11, 1
      %p75 = por %p73, %p74
      %p76 = scmp.ne.s32.totalorder %s68, %s71
      %p77 = scmp.eq.s32.totalorder %s11, 0
      %p78 = por %p76, %p77
      %p79 = scmp.ne.s32.totalorder %s68, %s71
      %p80 = scmp.eq.s32.totalorder %s16, 1
      %p81 = por %p79, %p80
      %p82 = scmp.ne.s32.totalorder %s71, %s72
      %p83 = scmp.eq.s32.totalorder %s16, 0
      %p84 = por %p82, %p83
      %p85 = scmp.ne.s32.totalorder %s71, %s72
      %p86 = scmp.eq.s32.totalorder %s17, 1
      %p87 = por %p85, %p86
      %p89 = scmp.ne.s32.totalorder %s72, %s88
      %p90 = scmp.eq.s32.totalorder %s17, 0
      %p91 = por %p89, %p90
      %s93 = sadd.s32 %s92, 1
      %p96 = scmp.eq.s32.totalorder %s11, 1
      %p97 = scmp.ne.s32.totalorder %s92, %s94
      %p98 = scmp.eq.s32.totalorder %s11, 0
      %p99 = por %p97, %p98
      %p100 = scmp.ne.s32.totalorder %s92, %s94
      %p101 = scmp.eq.s32.totalorder %s16, 1
      %p102 = por %p100, %p101
      %p103 = scmp.ne.s32.totalorder %s94, %s95
      %p104 = scmp.eq.s32.totalorder %s16, 0
      %p105 = por %p103, %p104
      %p106 = scmp.ne.s32.totalorder %s94, %s95
      %p107 = scmp.eq.s32.totalorder %s17, 1
      %p108 = por %p106, %p107
      %p110 = scmp.ne.s32.totalorder %s95, %s109
      %p111 = scmp.eq.s32.totalorder %s17, 0
      %p112 = por %p110, %p111
      %s113 = ssub.s32 %s11, %s18
      %p114 = scmp.eq.s32.totalorder %s113, 0
      %s116 = sadd.s32 %s115, 1
      %s117 = scalar_select %p114, %s115, %s116
      %p120 = pneg %p114
      %p121 = scmp.eq.s32.totalorder %s11, 1
      %p122 = por %p120, %p121
      %p123 = scmp.ne.s32.totalorder %s115, %s118
      %p124 = scmp.eq.s32.totalorder %s11, 0
      %p125 = por %p123, %p124
      %p126 = scmp.ne.s32.totalorder %s115, %s118
      %p127 = scmp.eq.s32.totalorder %s16, 1
      %p128 = por %p126, %p127
      %p129 = scmp.ne.s32.totalorder %s118, %s119
      %p130 = scmp.eq.s32.totalorder %s16, 0
      %p131 = por %p129, %p130
      %p132 = scmp.ne.s32.totalorder %s118, %s119
      %p133 = scmp.eq.s32.totalorder %s17, 1
      %p134 = por %p132, %p133
      %p136 = scmp.ne.s32.totalorder %s119, %s135
      %p137 = scmp.eq.s32.totalorder %s17, 0
      %p138 = por %p136, %p137
      %p139 = scmp.le.s32.totalorder 1, %s11
      %p140 = scmp.lt.s32.totalorder %s11, 3
      %p141 = pnand %p139, %p140
      %p142 = pneg %p141
      // Predicated region
      $region9: #{message_pass.1} parent=5 // pred_check
        _
      $region10: #{message_pass.1} parent=5 // pred_check_branch
        %144 = sbr.rel (%p141) target = $region12
      $region11: #{message_pass.1} parent=5 // pred_region
        %s145 = ssub.s32 %s11, 1
        // Predicated region
        $region13: #{message_pass.1} parent=11 // pred_check
          %p146 = pneg %p58
        $region14: #{message_pass.1} parent=11 // pred_check_branch
          %148 = sbr.rel (%p146) target = $region16
        $region15: #{message_pass.1} parent=11 // pred_region
          _
        $region16: #{message_pass.1} parent=11 // pred_fallthru
          _
        // Predicated region
        $region17: #{message_pass.1} parent=11 // pred_check
          %p149 = pneg %p105
        $region18: #{message_pass.1} parent=11 // pred_check_branch
          %151 = sbr.rel (%p149) target = $region20
        $region19: #{message_pass.1} parent=11 // pred_region
          %s153 = ssub.s32 16, 16
          %154 = vsyncadd [#allocation3], %s153
          %s156 = sshll.u32 %s3, 4
          %s157 = int_to_ptr.vmem [resolvable:$true] %s156
          %159 = dma.vmem_to_smem %s157, 16, [#allocation2], [#allocation3]
        $region20: #{message_pass.1} parent=11 // pred_fallthru
          _
      $region12: #{message_pass.1} parent=5 // pred_fallthru
        _
      %p160 = scmp.lt.s32.totalorder %s11, 2
      // Predicated region
      $region21: #{message_pass.1} parent=5 // pred_check
        %p161 = pneg %p160
      $region22: #{message_pass.1} parent=5 // pred_check_branch
        %163 = sbr.rel (%p161) target = $region24
      $region23: #{message_pass.1} parent=5 // pred_region
        // Predicated region
        $region25: #{message_pass.1} parent=23 // pred_check
          %p164 = pneg %p31
        $region26: #{message_pass.1} parent=23 // pred_check_branch
          %166 = sbr.rel (%p164) target = $region28
        $region27: #{message_pass.1} parent=23 // pred_region
          %p167 = scmp.lt.s32.totalorder %s11, 1
          %s168 = scalar_select %p167, %s11, 1
          %s169 = smul.addr %s168, 16
          %s170 = smul.addr %s169, 8
          %s171 = scalar_lea.vmem %s0, %s170
        $region28: #{message_pass.1} parent=23 // pred_fallthru
          _
        // Predicated region
        $region29: #{message_pass.1} parent=23 // pred_check
          %p172 = pneg %p78
        $region30: #{message_pass.1} parent=23 // pred_check_branch
          %174 = sbr.rel (%p172) target = $region32
        $region31: #{message_pass.1} parent=23 // pred_region
          %p175 = scmp.lt.s32.totalorder %s11, 1
          %s176 = scalar_select %p175, %s11, 1
          %s177 = smul.addr %s176, 4
          %s178 = smul.addr %s177, 4
          %s179 = scalar_lea.vmem %s2, %s178
        $region32: #{message_pass.1} parent=23 // pred_fallthru
          _
      $region24: #{message_pass.1} parent=5 // pred_fallthru
        _
      %p180 = scmp.le.s32.totalorder 1, %s11
      %p181 = scmp.lt.s32.totalorder %s11, 3
      %p182 = pnand %p180, %p181
      %p183 = pneg %p182
      // Predicated region
      $region33: #{message_pass.1} parent=5 // pred_check
        _
      $region34: #{message_pass.1} parent=5 // pred_check_branch
        %185 = sbr.rel (%p182) target = $region36
      $region35: #{message_pass.1} parent=5 // pred_region
        %s186 = ssub.s32 %s11, 1
        // Predicated region
        $region37: #{message_pass.1} parent=35 // pred_check
          %p187 = pneg %p105
        $region38: #{message_pass.1} parent=35 // pred_check_branch
          %189 = sbr.rel (%p187) target = $region40
        $region39: #{message_pass.1} parent=35 // pred_region
          %190 = dma.done [#allocation3], 16
        $region40: #{message_pass.1} parent=35 // pred_fallthru
          _
        %191 = sfence
        %p192 = scmp.lt.s32.totalorder %s16, 1
        %s193 = scalar_select %p192, %s16, 1
        %s194 = smul.addr %s193, 16
        %s195 = smul.addr %s194, 8
        %s196 = scalar_lea.vmem %s0, %s195
        %p197 = pneg %p37
        %p198 = pneg %p34
        %p199 = pneg %p58
        %p200 = pneg %p55
        %p201 = scmp.lt.s32.totalorder %s16, 1
        %s202 = scalar_select %p201, %s16, 1
        %s203 = smul.addr %s202, 4
        %s204 = smul.addr %s203, 4
        %s205 = scalar_lea.vmem %s2, %s204
        %p206 = pneg %p84
        %p207 = pneg %p81
        %p208 = pneg %p105
        %p209 = pneg %p102
        %p210 = pneg %p131
        %p211 = pneg %p128
        %p212 = scmp.lt.s32.totalorder %s16, 1
        %s213 = scalar_select %p212, %s16, 1
        %s214 = smul.addr %s213, 4
        %s215 = smul.addr %s214, 4
        %s216 = scalar_lea.vmem %s4, %s215
        %p217 = scmp.lt.s32.totalorder %s16, 1
        %s218 = scalar_select %p217, %s16, 1
        %s219 = smul.addr %s218, 16
        %s220 = smul.addr %s219, 8
        %s221 = scalar_lea.vmem %s0, %s220
        %p222 = scmp.lt.s32.totalorder %s16, 1
        %s223 = scalar_select %p222, %s16, 1
        %s224 = smul.addr %s223, 4
        %s225 = smul.addr %s224, 4
        %s226 = scalar_lea.vmem %s2, %s225
        %p227 = scmp.lt.s32.totalorder %s16, 1
        %s228 = scalar_select %p227, %s16, 1
        %s229 = smul.addr %s228, 4
        %s230 = smul.addr %s229, 4
        %s231 = scalar_lea.vmem %s4, %s230
        %v232 = vld [vmem:[%s226] sm:$0xff]
        %v233 = vld [vmem:[%s226 + $0x8] sm:$0xff]
        %s234 = sld [smem:[#allocation2]]
        %v235 = vstv %s234
        %v236 = vmul.f32 %v232, %v235
        %v237 = vmul.f32 %v233, %v235
        %s238 = sld [smem:[#allocation2 + $0x1]]
        %v239 = vstv %s238
        %v240 = vmul.f32 %v232, %v239
        %v241 = vmul.f32 %v233, %v239
        %v244 = vrot.slane %v240, 5
        %v245 = vrot.slane %v244, 4
        %v246 = vrot.slane %v241, 5
        %v247 = vrot.slane %v246, 4
        %v250 = vadd.f32 %v236, %v245
        %v251 = vadd.f32 %v237, %v247
        %s252 = sld [smem:[#allocation2 + $0x2]]
        %v253 = vstv %s252
        %v254 = vmul.f32 %v232, %v253
        %v255 = vmul.f32 %v233, %v253
        %v258 = vrot.slane %v254, 6
        %v259 = vrot.slane %v258, 4
        %v260 = vrot.slane %v255, 6
        %v261 = vrot.slane %v260, 4
        %v264 = vadd.f32 %v250, %v259
        %v265 = vadd.f32 %v251, %v261
        %s266 = sld [smem:[#allocation2 + $0x3]]
        %v267 = vstv %s266
        %v268 = vmul.f32 %v232, %v267
        %v269 = vmul.f32 %v233, %v267
        %v272 = vrot.slane %v268, 7
        %v273 = vrot.slane %v272, 4
        %v274 = vrot.slane %v269, 7
        %v275 = vrot.slane %v274, 4
        %v278 = vadd.f32 %v264, %v273
        %v279 = vadd.f32 %v265, %v275
        %v280 = vxor.u32 %v278, 2147483648
        %v281 = vxor.u32 %v279, 2147483648
        %v282 = vmul.f32 %v280, 1.442695
        %v283 = vpow.pop %v282
        %v284 = vmul.f32 %v281, 1.442695
        %v285 = vpow.pop %v284
        %v286 = vadd.f32 %v283, 1.0
        %v287 = vadd.f32 %v285, 1.0
        %v288 = vrcp.pop %v286
        %v289 = vmul.f32 1.0, %v288
        %v290 = vrcp.pop %v287
        %v291 = vmul.f32 1.0, %v290
        %v292 = vld [vmem:[%s221] sm:$0xff]
        %v293 = vld [vmem:[%s221 + $0x8] sm:$0xff]
        %v294 = vld [vmem:[%s221 + $0x10] sm:$0xff]
        %v295 = vld [vmem:[%s221 + $0x18] sm:$0xff]
        %v296 = vmul.f32 %v292, %v292
        %v297 = vmul.f32 %v293, %v293
        %v298 = vmul.f32 %v294, %v294
        %v299 = vmul.f32 %v295, %v295
        %v300 = vadd.f32 %v296, 0.0
        %v301 = vadd.f32 %v297, 0.0
        %v302 = vadd.f32 %v298, 0.0
        %v303 = vadd.f32 %v299, 0.0
        %v304 = vld [vmem:[%s221 + $0x20] sm:$0xff]
        %v305 = vld [vmem:[%s221 + $0x28] sm:$0xff]
        %v306 = vld [vmem:[%s221 + $0x30] sm:$0xff]
        %v307 = vld [vmem:[%s221 + $0x38] sm:$0xff]
        %v308 = vmul.f32 %v304, %v304
        %v309 = vmul.f32 %v305, %v305
        %v310 = vmul.f32 %v306, %v306
        %v311 = vmul.f32 %v307, %v307
        %v312 = vadd.f32 %v300, %v308
        %v313 = vadd.f32 %v301, %v309
        %v314 = vadd.f32 %v302, %v310
        %v315 = vadd.f32 %v303, %v311
        %v316 = vld [vmem:[%s221 + $0x40] sm:$0xff]
        %v317 = vld [vmem:[%s221 + $0x48] sm:$0xff]
        %v318 = vld [vmem:[%s221 + $0x50] sm:$0xff]
        %v319 = vld [vmem:[%s221 + $0x58] sm:$0xff]
        %v320 = vmul.f32 %v316, %v316
        %v321 = vmul.f32 %v317, %v317
        %v322 = vmul.f32 %v318, %v318
        %v323 = vmul.f32 %v319, %v319
        %v324 = vadd.f32 %v312, %v320
        %v325 = vadd.f32 %v313, %v321
        %v326 = vadd.f32 %v314, %v322
        %v327 = vadd.f32 %v315, %v323
        %v328 = vld [vmem:[%s221 + $0x60] sm:$0xff]
        %v329 = vld [vmem:[%s221 + $0x68] sm:$0xff]
        %v330 = vld [vmem:[%s221 + $0x70] sm:$0xff]
        %v331 = vld [vmem:[%s221 + $0x78] sm:$0xff]
        %v332 = vmul.f32 %v328, %v328
        %v333 = vmul.f32 %v329, %v329
        %v334 = vmul.f32 %v330, %v330
        %v335 = vmul.f32 %v331, %v331
        %v336 = vadd.f32 %v324, %v332
        %v337 = vadd.f32 %v325, %v333
        %v338 = vadd.f32 %v326, %v334
        %v339 = vadd.f32 %v327, %v335
        %v340 = vld [vmem:[%s1] sm:$0xff]
        %v341 = vld [vmem:[%s1 + $0x8] sm:$0xff]
        %v342 = vld [vmem:[%s1 + $0x10] sm:$0xff]
        %v343 = vld [vmem:[%s1 + $0x18] sm:$0xff]
        %v344 = vmul.f32 %v340, %v340
        %v345 = vmul.f32 %v341, %v341
        %v346 = vmul.f32 %v342, %v342
        %v347 = vmul.f32 %v343, %v343
        %v348 = vadd.f32 %v336, %v344
        %v349 = vadd.f32 %v337, %v345
        %v350 = vadd.f32 %v338, %v346
        %v351 = vadd.f32 %v339, %v347
        %v352 = vld [vmem:[%s1 + $0x20] sm:$0xff]
        %v353 = vld [vmem:[%s1 + $0x28] sm:$0xff]
        %v354 = vld [vmem:[%s1 + $0x30] sm:$0xff]
        %v355 = vld [vmem:[%s1 + $0x38] sm:$0xff]
        %v356 = vmul.f32 %v352, %v352
        %v357 = vmul.f32 %v353, %v353
        %v358 = vmul.f32 %v354, %v354
        %v359 = vmul.f32 %v355, %v355
        %v360 = vadd.f32 %v348, %v356
        %v361 = vadd.f32 %v349, %v357
        %v362 = vadd.f32 %v350, %v358
        %v363 = vadd.f32 %v351, %v359
        %v364 = vld [vmem:[%s1 + $0x40] sm:$0xff]
        %v365 = vld [vmem:[%s1 + $0x48] sm:$0xff]
        %v366 = vld [vmem:[%s1 + $0x50] sm:$0xff]
        %v367 = vld [vmem:[%s1 + $0x58] sm:$0xff]
        %v368 = vmul.f32 %v364, %v364
        %v369 = vmul.f32 %v365, %v365
        %v370 = vmul.f32 %v366, %v366
        %v371 = vmul.f32 %v367, %v367
        %v372 = vadd.f32 %v360, %v368
        %v373 = vadd.f32 %v361, %v369
        %v374 = vadd.f32 %v362, %v370
        %v375 = vadd.f32 %v363, %v371
        %v376 = vld [vmem:[%s1 + $0x60] sm:$0xff]
        %v377 = vld [vmem:[%s1 + $0x68] sm:$0xff]
        %v378 = vld [vmem:[%s1 + $0x70] sm:$0xff]
        %v379 = vld [vmem:[%s1 + $0x78] sm:$0xff]
        %v380 = vmul.f32 %v376, %v376
        %v381 = vmul.f32 %v377, %v377
        %v382 = vmul.f32 %v378, %v378
        %v383 = vmul.f32 %v379, %v379
        %v384 = vadd.f32 %v372, %v380
        %v385 = vadd.f32 %v373, %v381
        %v386 = vadd.f32 %v374, %v382
        %v387 = vadd.f32 %v375, %v383
        %v388 = vrot.slane %v384, 4
        %v389 = vadd.f32 %v384, %v388
        %v390 = vrot.slane %v389, 2
        %v391 = vadd.f32 %v389, %v390
        %v392 = vrot.slane %v391, 1
        %v393 = vadd.f32 %v391, %v392
        %v394 = vrot.slane %v385, 4
        %v395 = vadd.f32 %v385, %v394
        %v396 = vrot.slane %v395, 2
        %v397 = vadd.f32 %v395, %v396
        %v398 = vrot.slane %v397, 1
        %v399 = vadd.f32 %v397, %v398
        %v400 = vrot.slane %v386, 4
        %v401 = vadd.f32 %v386, %v400
        %v402 = vrot.slane %v401, 2
        %v403 = vadd.f32 %v401, %v402
        %v404 = vrot.slane %v403, 1
        %v405 = vadd.f32 %v403, %v404
        %v406 = vrot.slane %v387, 4
        %v407 = vadd.f32 %v387, %v406
        %v408 = vrot.slane %v407, 2
        %v409 = vadd.f32 %v407, %v408
        %v410 = vrot.slane %v409, 1
        %v411 = vadd.f32 %v409, %v410
        %v416 = vcombine.low %v393, %v399
        %v417 = vcombine.low %v405, %v411
        %v420 = vmul.f32 %v289, %v416
        %v421 = vmul.f32 %v291, %v417
        %v424 = vlaneseq
        %v425 = vshrl.u32 %v424, 7
        %v426 = vsub.s32 0, %v425
        %v427 = vrot.slane %v420, %v426
        %v428 = vlaneseq
        %v429 = vshrl.u32 %v428, 7
        %v430 = vsub.s32 4, %v429
        %v431 = vrot.slane %v420, %v430
        %v432 = vlaneseq
        %v433 = vshrl.u32 %v432, 7
        %v434 = vsub.s32 0, %v433
        %v435 = vrot.slane %v421, %v434
        %v436 = vlaneseq
        %v437 = vshrl.u32 %v436, 7
        %v438 = vsub.s32 4, %v437
        %v439 = vrot.slane %v421, %v438
        %v444 = vlaneseq
        %v445 = vshrl.u32 %v444, 7
        %v446 = vsub.s32 0, %v445
        %v447 = vrot.slane %v427, %v446
        %v448 = vlaneseq
        %v449 = vshrl.u32 %v448, 7
        %v450 = vsub.s32 0, %v449
        %v451 = vrot.slane %v431, %v450
        %v452 = vlaneseq
        %v453 = vshrl.u32 %v452, 7
        %v454 = vsub.s32 0, %v453
        %v455 = vrot.slane %v435, %v454
        %v456 = vlaneseq
        %v457 = vshrl.u32 %v456, 7
        %v458 = vsub.s32 0, %v457
        %v459 = vrot.slane %v439, %v458
        %v464 = vcombine.low %v447, %v451
        %v465 = vcombine.low %v455, %v459
        %v468 = vmul.f32 %v232, %v464
        %v469 = vmul.f32 %v233, %v465
        %v470 = vadd.f32 %v468, 0.0
        %v471 = vadd.f32 %v469, 0.0
        %472 = vrot.lane.b32.xlu0 %v292, 126
        %v473 = vpop.permute.xlu0 %472
        %474 = vrot.lane.b32.xlu0 %v293, 126
        %v475 = vpop.permute.xlu0 %474
        %476 = vrot.lane.b32.xlu0 %v294, 126
        %v477 = vpop.permute.xlu0 %476
        %478 = vrot.lane.b32.xlu0 %v295, 126
        %v479 = vpop.permute.xlu0 %478
        %v480 = vlaneseq
        %v481 = vand.u32 %v480, 127
        %vm482 = vcmp.lt.s32.totalorder %v481, 126
        %v483 = vsel %vm482, %v477, %v479
        %v484 = vsel %vm482, %v475, %v477
        %v485 = vsel %vm482, %v473, %v475
        %v486 = vsel %vm482, %v479, %v473
        %v487 = vmul.f32 %v292, %v485
        %v488 = vmul.f32 %v293, %v484
        %v489 = vmul.f32 %v294, %v483
        %v490 = vmul.f32 %v295, %v486
        %v491 = vadd.f32 %v487, 0.0
        %v492 = vadd.f32 %v488, 0.0
        %v493 = vadd.f32 %v489, 0.0
        %v494 = vadd.f32 %v490, 0.0
        %495 = vrot.lane.b32.xlu0 %v304, 126
        %v496 = vpop.permute.xlu0 %495
        %497 = vrot.lane.b32.xlu0 %v305, 126
        %v498 = vpop.permute.xlu0 %497
        %499 = vrot.lane.b32.xlu0 %v306, 126
        %v500 = vpop.permute.xlu0 %499
        %501 = vrot.lane.b32.xlu0 %v307, 126
        %v502 = vpop.permute.xlu0 %501
        %v503 = vsel %vm482, %v500, %v502
        %v504 = vsel %vm482, %v498, %v500
        %v505 = vsel %vm482, %v496, %v498
        %v506 = vsel %vm482, %v502, %v496
        %v507 = vmul.f32 %v304, %v505
        %v508 = vmul.f32 %v305, %v504
        %v509 = vmul.f32 %v306, %v503
        %v510 = vmul.f32 %v307, %v506
        %v511 = vadd.f32 %v491, %v507
        %v512 = vadd.f32 %v492, %v508
        %v513 = vadd.f32 %v493, %v509
        %v514 = vadd.f32 %v494, %v510
        %515 = vrot.lane.b32.xlu0 %v316, 126
        %v516 = vpop.permute.xlu0 %515
        %517 = vrot.lane.b32.xlu0 %v317, 126
        %v518 = vpop.permute.xlu0 %517
        %519 = vrot.lane.b32.xlu0 %v318, 126
        %v520 = vpop.permute.xlu0 %519
        %521 = vrot.lane.b32.xlu0 %v319, 126
        %v522 = vpop.permute.xlu0 %521
        %v523 = vsel %vm482, %v520, %v522
        %v524 = vsel %vm482, %v518, %v520
        %v525 = vsel %vm482, %v516, %v518
        %v526 = vsel %vm482, %v522, %v516
        %v527 = vmul.f32 %v316, %v525
        %v528 = vmul.f32 %v317, %v524
        %v529 = vmul.f32 %v318, %v523
        %v530 = vmul.f32 %v319, %v526
        %v531 = vadd.f32 %v511, %v527
        %v532 = vadd.f32 %v512, %v528
        %v533 = vadd.f32 %v513, %v529
        %v534 = vadd.f32 %v514, %v530
        %535 = vrot.lane.b32.xlu0 %v328, 126
        %v536 = vpop.permute.xlu0 %535
        %537 = vrot.lane.b32.xlu0 %v329, 126
        %v538 = vpop.permute.xlu0 %537
        %539 = vrot.lane.b32.xlu0 %v330, 126
        %v540 = vpop.permute.xlu0 %539
        %541 = vrot.lane.b32.xlu0 %v331, 126
        %v542 = vpop.permute.xlu0 %541
        %v543 = vsel %vm482, %v540, %v542
        %v544 = vsel %vm482, %v538, %v540
        %v545 = vsel %vm482, %v536, %v538
        %v546 = vsel %vm482, %v542, %v536
        %v547 = vmul.f32 %v328, %v545
        %v548 = vmul.f32 %v329, %v544
        %v549 = vmul.f32 %v330, %v543
        %v550 = vmul.f32 %v331, %v546
        %v551 = vadd.f32 %v531, %v547
        %v552 = vadd.f32 %v532, %v548
        %v553 = vadd.f32 %v533, %v549
        %v554 = vadd.f32 %v534, %v550
        %555 = vrot.lane.b32.xlu0 %v340, 126
        %v556 = vpop.permute.xlu0 %555
        %557 = vrot.lane.b32.xlu0 %v341, 126
        %v558 = vpop.permute.xlu0 %557
        %559 = vrot.lane.b32.xlu0 %v342, 126
        %v560 = vpop.permute.xlu0 %559
        %561 = vrot.lane.b32.xlu0 %v343, 126
        %v562 = vpop.permute.xlu0 %561
        %v563 = vsel %vm482, %v560, %v562
        %v564 = vsel %vm482, %v558, %v560
        %v565 = vsel %vm482, %v556, %v558
        %v566 = vsel %vm482, %v562, %v556
        %v567 = vmul.f32 %v340, %v565
        %v568 = vmul.f32 %v341, %v564
        %v569 = vmul.f32 %v342, %v563
        %v570 = vmul.f32 %v343, %v566
        %v571 = vadd.f32 %v551, %v567
        %v572 = vadd.f32 %v552, %v568
        %v573 = vadd.f32 %v553, %v569
        %v574 = vadd.f32 %v554, %v570
        %575 = vrot.lane.b32.xlu0 %v352, 126
        %v576 = vpop.permute.xlu0 %575
        %577 = vrot.lane.b32.xlu0 %v353, 126
        %v578 = vpop.permute.xlu0 %577
        %579 = vrot.lane.b32.xlu0 %v354, 126
        %v580 = vpop.permute.xlu0 %579
        %581 = vrot.lane.b32.xlu0 %v355, 126
        %v582 = vpop.permute.xlu0 %581
        %v583 = vsel %vm482, %v580, %v582
        %v584 = vsel %vm482, %v578, %v580
        %v585 = vsel %vm482, %v576, %v578
        %v586 = vsel %vm482, %v582, %v576
        %v587 = vmul.f32 %v352, %v585
        %v588 = vmul.f32 %v353, %v584
        %v589 = vmul.f32 %v354, %v583
        %v590 = vmul.f32 %v355, %v586
        %v591 = vadd.f32 %v571, %v587
        %v592 = vadd.f32 %v572, %v588
        %v593 = vadd.f32 %v573, %v589
        %v594 = vadd.f32 %v574, %v590
        %595 = vrot.lane.b32.xlu0 %v364, 126
        %v596 = vpop.permute.xlu0 %595
        %597 = vrot.lane.b32.xlu0 %v365, 126
        %v598 = vpop.permute.xlu0 %597
        %599 = vrot.lane.b32.xlu0 %v366, 126
        %v600 = vpop.permute.xlu0 %599
        %601 = vrot.lane.b32.xlu0 %v367, 126
        %v602 = vpop.permute.xlu0 %601
        %v603 = vsel %vm482, %v600, %v602
        %v604 = vsel %vm482, %v598, %v600
        %v605 = vsel %vm482, %v596, %v598
        %v606 = vsel %vm482, %v602, %v596
        %v607 = vmul.f32 %v364, %v605
        %v608 = vmul.f32 %v365, %v604
        %v609 = vmul.f32 %v366, %v603
        %v610 = vmul.f32 %v367, %v606
        %v611 = vadd.f32 %v591, %v607
        %v612 = vadd.f32 %v592, %v608
        %v613 = vadd.f32 %v593, %v609
        %v614 = vadd.f32 %v594, %v610
        %615 = vrot.lane.b32.xlu0 %v376, 126
        %v616 = vpop.permute.xlu0 %615
        %617 = vrot.lane.b32.xlu0 %v377, 126
        %v618 = vpop.permute.xlu0 %617
        %619 = vrot.lane.b32.xlu0 %v378, 126
        %v620 = vpop.permute.xlu0 %619
        %621 = vrot.lane.b32.xlu0 %v379, 126
        %v622 = vpop.permute.xlu0 %621
        %v623 = vsel %vm482, %v620, %v622
        %v624 = vsel %vm482, %v618, %v620
        %v625 = vsel %vm482, %v616, %v618
        %v626 = vsel %vm482, %v622, %v616
        %v627 = vmul.f32 %v376, %v625
        %v628 = vmul.f32 %v377, %v624
        %v629 = vmul.f32 %v378, %v623
        %v630 = vmul.f32 %v379, %v626
        %v631 = vadd.f32 %v611, %v627
        %v632 = vadd.f32 %v612, %v628
        %v633 = vadd.f32 %v613, %v629
        %v634 = vadd.f32 %v614, %v630
        %v635 = vrot.slane %v631, 4
        %v636 = vadd.f32 %v631, %v635
        %v637 = vrot.slane %v636, 2
        %v638 = vadd.f32 %v636, %v637
        %v639 = vrot.slane %v638, 1
        %v640 = vadd.f32 %v638, %v639
        %v641 = vrot.slane %v632, 4
        %v642 = vadd.f32 %v632, %v641
        %v643 = vrot.slane %v642, 2
        %v644 = vadd.f32 %v642, %v643
        %v645 = vrot.slane %v644, 1
        %v646 = vadd.f32 %v644, %v645
        %v647 = vrot.slane %v633, 4
        %v648 = vadd.f32 %v633, %v647
        %v649 = vrot.slane %v648, 2
        %v650 = vadd.f32 %v648, %v649
        %v651 = vrot.slane %v650, 1
        %v652 = vadd.f32 %v650, %v651
        %v653 = vrot.slane %v634, 4
        %v654 = vadd.f32 %v634, %v653
        %v655 = vrot.slane %v654, 2
        %v656 = vadd.f32 %v654, %v655
        %v657 = vrot.slane %v656, 1
        %v658 = vadd.f32 %v656, %v657
        %v661 = vcombine.high %v232, %v232
        %v662 = vcombine.high %v233, %v233
        %665 = vrot.lane.b32.xlu0 %v232, 126
        %v666 = vpop.permute.xlu0 %665
        %667 = vrot.lane.b32.xlu0 %v661, 126
        %v668 = vpop.permute.xlu0 %667
        %669 = vrot.lane.b32.xlu0 %v233, 126
        %v670 = vpop.permute.xlu0 %669
        %671 = vrot.lane.b32.xlu0 %v662, 126
        %v672 = vpop.permute.xlu0 %671
        %v673 = vsel %vm482, %v670, %v672
        %v674 = vsel %vm482, %v668, %v670
        %v675 = vsel %vm482, %v666, %v668
        %v676 = vsel %vm482, %v672, %v666
        %v679 = vlaneseq
        %v680 = vshrl.u32 %v679, 7
        %v681 = vsub.s32 0, %v680
        %v682 = vrot.slane %v289, %v681
        %v683 = vlaneseq
        %v684 = vshrl.u32 %v683, 7
        %v685 = vsub.s32 4, %v684
        %v686 = vrot.slane %v289, %v685
        %v687 = vlaneseq
        %v688 = vshrl.u32 %v687, 7
        %v689 = vsub.s32 0, %v688
        %v690 = vrot.slane %v291, %v689
        %v691 = vlaneseq
        %v692 = vshrl.u32 %v691, 7
        %v693 = vsub.s32 4, %v692
        %v694 = vrot.slane %v291, %v693
        %699 = vrot.lane.b32.xlu0 %v682, 126
        %v700 = vpop.permute.xlu0 %699
        %701 = vrot.lane.b32.xlu0 %v686, 126
        %v702 = vpop.permute.xlu0 %701
        %703 = vrot.lane.b32.xlu0 %v690, 126
        %v704 = vpop.permute.xlu0 %703
        %705 = vrot.lane.b32.xlu0 %v694, 126
        %v706 = vpop.permute.xlu0 %705
        %v707 = vsel %vm482, %v704, %v706
        %v708 = vsel %vm482, %v702, %v704
        %v709 = vsel %vm482, %v700, %v702
        %v710 = vsel %vm482, %v706, %v700
        %v711 = vmul.f32 %v709, %v640
        %v712 = vmul.f32 %v708, %v646
        %v713 = vmul.f32 %v707, %v652
        %v714 = vmul.f32 %v710, %v658
        %v715 = vlaneseq
        %v716 = vshrl.u32 %v715, 7
        %v717 = vsub.s32 0, %v716
        %v718 = vrot.slane %v711, %v717
        %v719 = vlaneseq
        %v720 = vshrl.u32 %v719, 7
        %v721 = vsub.s32 0, %v720
        %v722 = vrot.slane %v712, %v721
        %v723 = vlaneseq
        %v724 = vshrl.u32 %v723, 7
        %v725 = vsub.s32 0, %v724
        %v726 = vrot.slane %v713, %v725
        %v727 = vlaneseq
        %v728 = vshrl.u32 %v727, 7
        %v729 = vsub.s32 0, %v728
        %v730 = vrot.slane %v714, %v729
        %v731 = vmul.f32 %v675, %v718
        %v732 = vmul.f32 %v674, %v722
        %v733 = vmul.f32 %v673, %v726
        %v734 = vmul.f32 %v676, %v730
        %v739 = vcombine.low %v731, %v732
        %v740 = vcombine.low %v733, %v734
        %v743 = vadd.f32 %v470, %v739
        %v744 = vadd.f32 %v471, %v740
        %745 = vrot.lane.b32.xlu0 %v640, 2
        %v746 = vpop.permute.xlu0 %745
        %747 = vrot.lane.b32.xlu0 %v646, 2
        %v748 = vpop.permute.xlu0 %747
        %749 = vrot.lane.b32.xlu0 %v652, 2
        %v750 = vpop.permute.xlu0 %749
        %751 = vrot.lane.b32.xlu0 %v658, 2
        %v752 = vpop.permute.xlu0 %751
        %vm753 = vcmp.lt.s32.totalorder %v481, 2
        %v754 = vsel %vm753, %v750, %v752
        %v755 = vsel %vm753, %v748, %v750
        %v756 = vsel %vm753, %v746, %v748
        %v757 = vsel %vm753, %v752, %v746
        %758 = vrot.lane.b32.xlu0 %v232, 2
        %v759 = vpop.permute.xlu0 %758
        %760 = vrot.lane.b32.xlu0 %v661, 2
        %v761 = vpop.permute.xlu0 %760
        %762 = vrot.lane.b32.xlu0 %v233, 2
        %v763 = vpop.permute.xlu0 %762
        %764 = vrot.lane.b32.xlu0 %v662, 2
        %v765 = vpop.permute.xlu0 %764
        %v766 = vsel %vm753, %v763, %v765
        %v767 = vsel %vm753, %v761, %v763
        %v768 = vsel %vm753, %v759, %v761
        %v769 = vsel %vm753, %v765, %v759
        %770 = vrot.lane.b32.xlu0 %v682, 2
        %v771 = vpop.permute.xlu0 %770
        %772 = vrot.lane.b32.xlu0 %v686, 2
        %v773 = vpop.permute.xlu0 %772
        %774 = vrot.lane.b32.xlu0 %v690, 2
        %v775 = vpop.permute.xlu0 %774
        %776 = vrot.lane.b32.xlu0 %v694, 2
        %v777 = vpop.permute.xlu0 %776
        %v778 = vsel %vm753, %v775, %v777
        %v779 = vsel %vm753, %v773, %v775
        %v780 = vsel %vm753, %v771, %v773
        %v781 = vsel %vm753, %v777, %v771
        %v782 = vmul.f32 %v781, %v757
        %v783 = vmul.f32 %v780, %v756
        %v784 = vmul.f32 %v779, %v755
        %v785 = vmul.f32 %v778, %v754
        %v786 = vlaneseq
        %v787 = vshrl.u32 %v786, 7
        %v788 = vsub.s32 0, %v787
        %v789 = vrot.slane %v782, %v788
        %v790 = vlaneseq
        %v791 = vshrl.u32 %v790, 7
        %v792 = vsub.s32 0, %v791
        %v793 = vrot.slane %v783, %v792
        %v794 = vlaneseq
        %v795 = vshrl.u32 %v794, 7
        %v796 = vsub.s32 0, %v795
        %v797 = vrot.slane %v784, %v796
        %v798 = vlaneseq
        %v799 = vshrl.u32 %v798, 7
        %v800 = vsub.s32 0, %v799
        %v801 = vrot.slane %v785, %v800
        %v802 = vmul.f32 %v769, %v789
        %v803 = vmul.f32 %v768, %v793
        %v804 = vmul.f32 %v767, %v797
        %v805 = vmul.f32 %v766, %v801
        %v810 = vcombine.low %v802, %v803
        %v811 = vcombine.low %v804, %v805
        %v814 = vadd.f32 %v743, %v810
        %v815 = vadd.f32 %v744, %v811
        %816 = vrot.lane.b32.xlu0 %v292, 90
        %v817 = vpop.permute.xlu0 %816
        %818 = vrot.lane.b32.xlu0 %v293, 90
        %v819 = vpop.permute.xlu0 %818
        %820 = vrot.lane.b32.xlu0 %v294, 90
        %v821 = vpop.permute.xlu0 %820
        %822 = vrot.lane.b32.xlu0 %v295, 90
        %v823 = vpop.permute.xlu0 %822
        %vm824 = vcmp.lt.s32.totalorder %v481, 90
        %v825 = vsel %vm824, %v821, %v823
        %v826 = vsel %vm824, %v819, %v821
        %v827 = vsel %vm824, %v817, %v819
        %v828 = vsel %vm824, %v823, %v817
        %v829 = vmul.f32 %v292, %v827
        %v830 = vmul.f32 %v293, %v826
        %v831 = vmul.f32 %v294, %v825
        %v832 = vmul.f32 %v295, %v828
        %v833 = vadd.f32 %v829, 0.0
        %v834 = vadd.f32 %v830, 0.0
        %v835 = vadd.f32 %v831, 0.0
        %v836 = vadd.f32 %v832, 0.0
        %837 = vrot.lane.b32.xlu0 %v304, 90
        %v838 = vpop.permute.xlu0 %837
        %839 = vrot.lane.b32.xlu0 %v305, 90
        %v840 = vpop.permute.xlu0 %839
        %841 = vrot.lane.b32.xlu0 %v306, 90
        %v842 = vpop.permute.xlu0 %841
        %843 = vrot.lane.b32.xlu0 %v307, 90
        %v844 = vpop.permute.xlu0 %843
        %v845 = vsel %vm824, %v842, %v844
        %v846 = vsel %vm824, %v840, %v842
        %v847 = vsel %vm824, %v838, %v840
        %v848 = vsel %vm824, %v844, %v838
        %v849 = vmul.f32 %v304, %v847
        %v850 = vmul.f32 %v305, %v846
        %v851 = vmul.f32 %v306, %v845
        %v852 = vmul.f32 %v307, %v848
        %v853 = vadd.f32 %v833, %v849
        %v854 = vadd.f32 %v834, %v850
        %v855 = vadd.f32 %v835, %v851
        %v856 = vadd.f32 %v836, %v852
        %857 = vrot.lane.b32.xlu0 %v316, 90
        %v858 = vpop.permute.xlu0 %857
        %859 = vrot.lane.b32.xlu0 %v317, 90
        %v860 = vpop.permute.xlu0 %859
        %861 = vrot.lane.b32.xlu0 %v318, 90
        %v862 = vpop.permute.xlu0 %861
        %863 = vrot.lane.b32.xlu0 %v319, 90
        %v864 = vpop.permute.xlu0 %863
        %v865 = vsel %vm824, %v862, %v864
        %v866 = vsel %vm824, %v860, %v862
        %v867 = vsel %vm824, %v858, %v860
        %v868 = vsel %vm824, %v864, %v858
        %v869 = vmul.f32 %v316, %v867
        %v870 = vmul.f32 %v317, %v866
        %v871 = vmul.f32 %v318, %v865
        %v872 = vmul.f32 %v319, %v868
        %v873 = vadd.f32 %v853, %v869
        %v874 = vadd.f32 %v854, %v870
        %v875 = vadd.f32 %v855, %v871
        %v876 = vadd.f32 %v856, %v872
        %877 = vrot.lane.b32.xlu0 %v328, 90
        %v878 = vpop.permute.xlu0 %877
        %879 = vrot.lane.b32.xlu0 %v329, 90
        %v880 = vpop.permute.xlu0 %879
        %881 = vrot.lane.b32.xlu0 %v330, 90
        %v882 = vpop.permute.xlu0 %881
        %883 = vrot.lane.b32.xlu0 %v331, 90
        %v884 = vpop.permute.xlu0 %883
        %v885 = vsel %vm824, %v882, %v884
        %v886 = vsel %vm824, %v880, %v882
        %v887 = vsel %vm824, %v878, %v880
        %v888 = vsel %vm824, %v884, %v878
        %v889 = vmul.f32 %v328, %v887
        %v890 = vmul.f32 %v329, %v886
        %v891 = vmul.f32 %v330, %v885
        %v892 = vmul.f32 %v331, %v888
        %v893 = vadd.f32 %v873, %v889
        %v894 = vadd.f32 %v874, %v890
        %v895 = vadd.f32 %v875, %v891
        %v896 = vadd.f32 %v876, %v892
        %897 = vrot.lane.b32.xlu0 %v340, 90
        %v898 = vpop.permute.xlu0 %897
        %899 = vrot.lane.b32.xlu0 %v341, 90
        %v900 = vpop.permute.xlu0 %899
        %901 = vrot.lane.b32.xlu0 %v342, 90
        %v902 = vpop.permute.xlu0 %901
        %903 = vrot.lane.b32.xlu0 %v343, 90
        %v904 = vpop.permute.xlu0 %903
        %v905 = vsel %vm824, %v902, %v904
        %v906 = vsel %vm824, %v900, %v902
        %v907 = vsel %vm824, %v898, %v900
        %v908 = vsel %vm824, %v904, %v898
        %v909 = vmul.f32 %v340, %v907
        %v910 = vmul.f32 %v341, %v906
        %v911 = vmul.f32 %v342, %v905
        %v912 = vmul.f32 %v343, %v908
        %v913 = vadd.f32 %v893, %v909
        %v914 = vadd.f32 %v894, %v910
        %v915 = vadd.f32 %v895, %v911
        %v916 = vadd.f32 %v896, %v912
        %917 = vrot.lane.b32.xlu0 %v352, 90
        %v918 = vpop.permute.xlu0 %917
        %919 = vrot.lane.b32.xlu0 %v353, 90
        %v920 = vpop.permute.xlu0 %919
        %921 = vrot.lane.b32.xlu0 %v354, 90
        %v922 = vpop.permute.xlu0 %921
        %923 = vrot.lane.b32.xlu0 %v355, 90
        %v924 = vpop.permute.xlu0 %923
        %v925 = vsel %vm824, %v922, %v924
        %v926 = vsel %vm824, %v920, %v922
        %v927 = vsel %vm824, %v918, %v920
        %v928 = vsel %vm824, %v924, %v918
        %v929 = vmul.f32 %v352, %v927
        %v930 = vmul.f32 %v353, %v926
        %v931 = vmul.f32 %v354, %v925
        %v932 = vmul.f32 %v355, %v928
        %v933 = vadd.f32 %v913, %v929
        %v934 = vadd.f32 %v914, %v930
        %v935 = vadd.f32 %v915, %v931
        %v936 = vadd.f32 %v916, %v932
        %937 = vrot.lane.b32.xlu0 %v364, 90
        %v938 = vpop.permute.xlu0 %937
        %939 = vrot.lane.b32.xlu0 %v365, 90
        %v940 = vpop.permute.xlu0 %939
        %941 = vrot.lane.b32.xlu0 %v366, 90
        %v942 = vpop.permute.xlu0 %941
        %943 = vrot.lane.b32.xlu0 %v367, 90
        %v944 = vpop.permute.xlu0 %943
        %v945 = vsel %vm824, %v942, %v944
        %v946 = vsel %vm824, %v940, %v942
        %v947 = vsel %vm824, %v938, %v940
        %v948 = vsel %vm824, %v944, %v938
        %v949 = vmul.f32 %v364, %v947
        %v950 = vmul.f32 %v365, %v946
        %v951 = vmul.f32 %v366, %v945
        %v952 = vmul.f32 %v367, %v948
        %v953 = vadd.f32 %v933, %v949
        %v954 = vadd.f32 %v934, %v950
        %v955 = vadd.f32 %v935, %v951
        %v956 = vadd.f32 %v936, %v952
        %957 = vrot.lane.b32.xlu0 %v376, 90
        %v958 = vpop.permute.xlu0 %957
        %959 = vrot.lane.b32.xlu0 %v377, 90
        %v960 = vpop.permute.xlu0 %959
        %961 = vrot.lane.b32.xlu0 %v378, 90
        %v962 = vpop.permute.xlu0 %961
        %963 = vrot.lane.b32.xlu0 %v379, 90
        %v964 = vpop.permute.xlu0 %963
        %v965 = vsel %vm824, %v962, %v964
        %v966 = vsel %vm824, %v960, %v962
        %v967 = vsel %vm824, %v958, %v960
        %v968 = vsel %vm824, %v964, %v958
        %v969 = vmul.f32 %v376, %v967
        %v970 = vmul.f32 %v377, %v966
        %v971 = vmul.f32 %v378, %v965
        %v972 = vmul.f32 %v379, %v968
        %v973 = vadd.f32 %v953, %v969
        %v974 = vadd.f32 %v954, %v970
        %v975 = vadd.f32 %v955, %v971
        %v976 = vadd.f32 %v956, %v972
        %v977 = vrot.slane %v973, 4
        %v978 = vadd.f32 %v973, %v977
        %v979 = vrot.slane %v978, 2
        %v980 = vadd.f32 %v978, %v979
        %v981 = vrot.slane %v980, 1
        %v982 = vadd.f32 %v980, %v981
        %v983 = vrot.slane %v974, 4
        %v984 = vadd.f32 %v974, %v983
        %v985 = vrot.slane %v984, 2
        %v986 = vadd.f32 %v984, %v985
        %v987 = vrot.slane %v986, 1
        %v988 = vadd.f32 %v986, %v987
        %v989 = vrot.slane %v975, 4
        %v990 = vadd.f32 %v975, %v989
        %v991 = vrot.slane %v990, 2
        %v992 = vadd.f32 %v990, %v991
        %v993 = vrot.slane %v992, 1
        %v994 = vadd.f32 %v992, %v993
        %v995 = vrot.slane %v976, 4
        %v996 = vadd.f32 %v976, %v995
        %v997 = vrot.slane %v996, 2
        %v998 = vadd.f32 %v996, %v997
        %v999 = vrot.slane %v998, 1
        %v1000 = vadd.f32 %v998, %v999
        %1001 = vrot.lane.b32.xlu0 %v232, 90
        %v1002 = vpop.permute.xlu0 %1001
        %1003 = vrot.lane.b32.xlu0 %v661, 90
        %v1004 = vpop.permute.xlu0 %1003
        %1005 = vrot.lane.b32.xlu0 %v233, 90
        %v1006 = vpop.permute.xlu0 %1005
        %1007 = vrot.lane.b32.xlu0 %v662, 90
        %v1008 = vpop.permute.xlu0 %1007
        %v1009 = vsel %vm824, %v1006, %v1008
        %v1010 = vsel %vm824, %v1004, %v1006
        %v1011 = vsel %vm824, %v1002, %v1004
        %v1012 = vsel %vm824, %v1008, %v1002
        %1013 = vrot.lane.b32.xlu0 %v682, 90
        %v1014 = vpop.permute.xlu0 %1013
        %1015 = vrot.lane.b32.xlu0 %v686, 90
        %v1016 = vpop.permute.xlu0 %1015
        %1017 = vrot.lane.b32.xlu0 %v690, 90
        %v1018 = vpop.permute.xlu0 %1017
        %1019 = vrot.lane.b32.xlu0 %v694, 90
        %v1020 = vpop.permute.xlu0 %1019
        %v1021 = vsel %vm824, %v1018, %v1020
        %v1022 = vsel %vm824, %v1016, %v1018
        %v1023 = vsel %vm824, %v1014, %v1016
        %v1024 = vsel %vm824, %v1020, %v1014
        %v1025 = vmul.f32 %v1023, %v982
        %v1026 = vmul.f32 %v1022, %v988
        %v1027 = vmul.f32 %v1021, %v994
        %v1028 = vmul.f32 %v1024, %v1000
        %v1029 = vlaneseq
        %v1030 = vshrl.u32 %v1029, 7
        %v1031 = vsub.s32 0, %v1030
        %v1032 = vrot.slane %v1025, %v1031
        %v1033 = vlaneseq
        %v1034 = vshrl.u32 %v1033, 7
        %v1035 = vsub.s32 0, %v1034
        %v1036 = vrot.slane %v1026, %v1035
        %v1037 = vlaneseq
        %v1038 = vshrl.u32 %v1037, 7
        %v1039 = vsub.s32 0, %v1038
        %v1040 = vrot.slane %v1027, %v1039
        %v1041 = vlaneseq
        %v1042 = vshrl.u32 %v1041, 7
        %v1043 = vsub.s32 0, %v1042
        %v1044 = vrot.slane %v1028, %v1043
        %v1045 = vmul.f32 %v1011, %v1032
        %v1046 = vmul.f32 %v1010, %v1036
        %v1047 = vmul.f32 %v1009, %v1040
        %v1048 = vmul.f32 %v1012, %v1044
        %v1053 = vcombine.low %v1045, %v1046
        %v1054 = vcombine.low %v1047, %v1048
        %v1057 = vadd.f32 %v814, %v1053
        %v1058 = vadd.f32 %v815, %v1054
        %1059 = vrot.lane.b32.xlu0 %v982, 38
        %v1060 = vpop.permute.xlu0 %1059
        %1061 = vrot.lane.b32.xlu0 %v988, 38
        %v1062 = vpop.permute.xlu0 %1061
        %1063 = vrot.lane.b32.xlu0 %v994, 38
        %v1064 = vpop.permute.xlu0 %1063
        %1065 = vrot.lane.b32.xlu0 %v1000, 38
        %v1066 = vpop.permute.xlu0 %1065
        %vm1067 = vcmp.lt.s32.totalorder %v481, 38
        %v1068 = vsel %vm1067, %v1064, %v1066
        %v1069 = vsel %vm1067, %v1062, %v1064
        %v1070 = vsel %vm1067, %v1060, %v1062
        %v1071 = vsel %vm1067, %v1066, %v1060
        %1072 = vrot.lane.b32.xlu0 %v232, 38
        %v1073 = vpop.permute.xlu0 %1072
        %1074 = vrot.lane.b32.xlu0 %v661, 38
        %v1075 = vpop.permute.xlu0 %1074
        %1076 = vrot.lane.b32.xlu0 %v233, 38
        %v1077 = vpop.permute.xlu0 %1076
        %1078 = vrot.lane.b32.xlu0 %v662, 38
        %v1079 = vpop.permute.xlu0 %1078
        %v1080 = vsel %vm1067, %v1077, %v1079
        %v1081 = vsel %vm1067, %v1075, %v1077
        %v1082 = vsel %vm1067, %v1073, %v1075
        %v1083 = vsel %vm1067, %v1079, %v1073
        %1084 = vrot.lane.b32.xlu0 %v682, 38
        %v1085 = vpop.permute.xlu0 %1084
        %1086 = vrot.lane.b32.xlu0 %v686, 38
        %v1087 = vpop.permute.xlu0 %1086
        %1088 = vrot.lane.b32.xlu0 %v690, 38
        %v1089 = vpop.permute.xlu0 %1088
        %1090 = vrot.lane.b32.xlu0 %v694, 38
        %v1091 = vpop.permute.xlu0 %1090
        %v1092 = vsel %vm1067, %v1089, %v1091
        %v1093 = vsel %vm1067, %v1087, %v1089
        %v1094 = vsel %vm1067, %v1085, %v1087
        %v1095 = vsel %vm1067, %v1091, %v1085
        %v1096 = vmul.f32 %v1095, %v1071
        %v1097 = vmul.f32 %v1094, %v1070
        %v1098 = vmul.f32 %v1093, %v1069
        %v1099 = vmul.f32 %v1092, %v1068
        %v1100 = vlaneseq
        %v1101 = vshrl.u32 %v1100, 7
        %v1102 = vsub.s32 0, %v1101
        %v1103 = vrot.slane %v1096, %v1102
        %v1104 = vlaneseq
        %v1105 = vshrl.u32 %v1104, 7
        %v1106 = vsub.s32 0, %v1105
        %v1107 = vrot.slane %v1097, %v1106
        %v1108 = vlaneseq
        %v1109 = vshrl.u32 %v1108, 7
        %v1110 = vsub.s32 0, %v1109
        %v1111 = vrot.slane %v1098, %v1110
        %v1112 = vlaneseq
        %v1113 = vshrl.u32 %v1112, 7
        %v1114 = vsub.s32 0, %v1113
        %v1115 = vrot.slane %v1099, %v1114
        %v1116 = vmul.f32 %v1083, %v1103
        %v1117 = vmul.f32 %v1082, %v1107
        %v1118 = vmul.f32 %v1081, %v1111
        %v1119 = vmul.f32 %v1080, %v1115
        %v1124 = vcombine.low %v1116, %v1117
        %v1125 = vcombine.low %v1118, %v1119
        %v1128 = vadd.f32 %v1057, %v1124
        %v1129 = vadd.f32 %v1058, %v1125
        %1130 = vrot.lane.b32.xlu0 %v292, 88
        %v1131 = vpop.permute.xlu0 %1130
        %1132 = vrot.lane.b32.xlu0 %v293, 88
        %v1133 = vpop.permute.xlu0 %1132
        %1134 = vrot.lane.b32.xlu0 %v294, 88
        %v1135 = vpop.permute.xlu0 %1134
        %1136 = vrot.lane.b32.xlu0 %v295, 88
        %v1137 = vpop.permute.xlu0 %1136
        %vm1138 = vcmp.lt.s32.totalorder %v481, 88
        %v1139 = vsel %vm1138, %v1135, %v1137
        %v1140 = vsel %vm1138, %v1133, %v1135
        %v1141 = vsel %vm1138, %v1131, %v1133
        %v1142 = vsel %vm1138, %v1137, %v1131
        %v1143 = vmul.f32 %v292, %v1141
        %v1144 = vmul.f32 %v293, %v1140
        %v1145 = vmul.f32 %v294, %v1139
        %v1146 = vmul.f32 %v295, %v1142
        %v1147 = vadd.f32 %v1143, 0.0
        %v1148 = vadd.f32 %v1144, 0.0
        %v1149 = vadd.f32 %v1145, 0.0
        %v1150 = vadd.f32 %v1146, 0.0
        %1151 = vrot.lane.b32.xlu0 %v304, 88
        %v1152 = vpop.permute.xlu0 %1151
        %1153 = vrot.lane.b32.xlu0 %v305, 88
        %v1154 = vpop.permute.xlu0 %1153
        %1155 = vrot.lane.b32.xlu0 %v306, 88
        %v1156 = vpop.permute.xlu0 %1155
        %1157 = vrot.lane.b32.xlu0 %v307, 88
        %v1158 = vpop.permute.xlu0 %1157
        %v1159 = vsel %vm1138, %v1156, %v1158
        %v1160 = vsel %vm1138, %v1154, %v1156
        %v1161 = vsel %vm1138, %v1152, %v1154
        %v1162 = vsel %vm1138, %v1158, %v1152
        %v1163 = vmul.f32 %v304, %v1161
        %v1164 = vmul.f32 %v305, %v1160
        %v1165 = vmul.f32 %v306, %v1159
        %v1166 = vmul.f32 %v307, %v1162
        %v1167 = vadd.f32 %v1147, %v1163
        %v1168 = vadd.f32 %v1148, %v1164
        %v1169 = vadd.f32 %v1149, %v1165
        %v1170 = vadd.f32 %v1150, %v1166
        %1171 = vrot.lane.b32.xlu0 %v316, 88
        %v1172 = vpop.permute.xlu0 %1171
        %1173 = vrot.lane.b32.xlu0 %v317, 88
        %v1174 = vpop.permute.xlu0 %1173
        %1175 = vrot.lane.b32.xlu0 %v318, 88
        %v1176 = vpop.permute.xlu0 %1175
        %1177 = vrot.lane.b32.xlu0 %v319, 88
        %v1178 = vpop.permute.xlu0 %1177
        %v1179 = vsel %vm1138, %v1176, %v1178
        %v1180 = vsel %vm1138, %v1174, %v1176
        %v1181 = vsel %vm1138, %v1172, %v1174
        %v1182 = vsel %vm1138, %v1178, %v1172
        %v1183 = vmul.f32 %v316, %v1181
        %v1184 = vmul.f32 %v317, %v1180
        %v1185 = vmul.f32 %v318, %v1179
        %v1186 = vmul.f32 %v319, %v1182
        %v1187 = vadd.f32 %v1167, %v1183
        %v1188 = vadd.f32 %v1168, %v1184
        %v1189 = vadd.f32 %v1169, %v1185
        %v1190 = vadd.f32 %v1170, %v1186
        %1191 = vrot.lane.b32.xlu0 %v328, 88
        %v1192 = vpop.permute.xlu0 %1191
        %1193 = vrot.lane.b32.xlu0 %v329, 88
        %v1194 = vpop.permute.xlu0 %1193
        %1195 = vrot.lane.b32.xlu0 %v330, 88
        %v1196 = vpop.permute.xlu0 %1195
        %1197 = vrot.lane.b32.xlu0 %v331, 88
        %v1198 = vpop.permute.xlu0 %1197
        %v1199 = vsel %vm1138, %v1196, %v1198
        %v1200 = vsel %vm1138, %v1194, %v1196
        %v1201 = vsel %vm1138, %v1192, %v1194
        %v1202 = vsel %vm1138, %v1198, %v1192
        %v1203 = vmul.f32 %v328, %v1201
        %v1204 = vmul.f32 %v329, %v1200
        %v1205 = vmul.f32 %v330, %v1199
        %v1206 = vmul.f32 %v331, %v1202
        %v1207 = vadd.f32 %v1187, %v1203
        %v1208 = vadd.f32 %v1188, %v1204
        %v1209 = vadd.f32 %v1189, %v1205
        %v1210 = vadd.f32 %v1190, %v1206
        %1211 = vrot.lane.b32.xlu0 %v340, 88
        %v1212 = vpop.permute.xlu0 %1211
        %1213 = vrot.lane.b32.xlu0 %v341, 88
        %v1214 = vpop.permute.xlu0 %1213
        %1215 = vrot.lane.b32.xlu0 %v342, 88
        %v1216 = vpop.permute.xlu0 %1215
        %1217 = vrot.lane.b32.xlu0 %v343, 88
        %v1218 = vpop.permute.xlu0 %1217
        %v1219 = vsel %vm1138, %v1216, %v1218
        %v1220 = vsel %vm1138, %v1214, %v1216
        %v1221 = vsel %vm1138, %v1212, %v1214
        %v1222 = vsel %vm1138, %v1218, %v1212
        %v1223 = vmul.f32 %v340, %v1221
        %v1224 = vmul.f32 %v341, %v1220
        %v1225 = vmul.f32 %v342, %v1219
        %v1226 = vmul.f32 %v343, %v1222
        %v1227 = vadd.f32 %v1207, %v1223
        %v1228 = vadd.f32 %v1208, %v1224
        %v1229 = vadd.f32 %v1209, %v1225
        %v1230 = vadd.f32 %v1210, %v1226
        %1231 = vrot.lane.b32.xlu0 %v352, 88
        %v1232 = vpop.permute.xlu0 %1231
        %1233 = vrot.lane.b32.xlu0 %v353, 88
        %v1234 = vpop.permute.xlu0 %1233
        %1235 = vrot.lane.b32.xlu0 %v354, 88
        %v1236 = vpop.permute.xlu0 %1235
        %1237 = vrot.lane.b32.xlu0 %v355, 88
        %v1238 = vpop.permute.xlu0 %1237
        %v1239 = vsel %vm1138, %v1236, %v1238
        %v1240 = vsel %vm1138, %v1234, %v1236
        %v1241 = vsel %vm1138, %v1232, %v1234
        %v1242 = vsel %vm1138, %v1238, %v1232
        %v1243 = vmul.f32 %v352, %v1241
        %v1244 = vmul.f32 %v353, %v1240
        %v1245 = vmul.f32 %v354, %v1239
        %v1246 = vmul.f32 %v355, %v1242
        %v1247 = vadd.f32 %v1227, %v1243
        %v1248 = vadd.f32 %v1228, %v1244
        %v1249 = vadd.f32 %v1229, %v1245
        %v1250 = vadd.f32 %v1230, %v1246
        %1251 = vrot.lane.b32.xlu0 %v364, 88
        %v1252 = vpop.permute.xlu0 %1251
        %1253 = vrot.lane.b32.xlu0 %v365, 88
        %v1254 = vpop.permute.xlu0 %1253
        %1255 = vrot.lane.b32.xlu0 %v366, 88
        %v1256 = vpop.permute.xlu0 %1255
        %1257 = vrot.lane.b32.xlu0 %v367, 88
        %v1258 = vpop.permute.xlu0 %1257
        %v1259 = vsel %vm1138, %v1256, %v1258
        %v1260 = vsel %vm1138, %v1254, %v1256
        %v1261 = vsel %vm1138, %v1252, %v1254
        %v1262 = vsel %vm1138, %v1258, %v1252
        %v1263 = vmul.f32 %v364, %v1261
        %v1264 = vmul.f32 %v365, %v1260
        %v1265 = vmul.f32 %v366, %v1259
        %v1266 = vmul.f32 %v367, %v1262
        %v1267 = vadd.f32 %v1247, %v1263
        %v1268 = vadd.f32 %v1248, %v1264
        %v1269 = vadd.f32 %v1249, %v1265
        %v1270 = vadd.f32 %v1250, %v1266
        %1271 = vrot.lane.b32.xlu0 %v376, 88
        %v1272 = vpop.permute.xlu0 %1271
        %1273 = vrot.lane.b32.xlu0 %v377, 88
        %v1274 = vpop.permute.xlu0 %1273
        %1275 = vrot.lane.b32.xlu0 %v378, 88
        %v1276 = vpop.permute.xlu0 %1275
        %1277 = vrot.lane.b32.xlu0 %v379, 88
        %v1278 = vpop.permute.xlu0 %1277
        %v1279 = vsel %vm1138, %v1276, %v1278
        %v1280 = vsel %vm1138, %v1274, %v1276
        %v1281 = vsel %vm1138, %v1272, %v1274
        %v1282 = vsel %vm1138, %v1278, %v1272
        %v1283 = vmul.f32 %v376, %v1281
        %v1284 = vmul.f32 %v377, %v1280
        %v1285 = vmul.f32 %v378, %v1279
        %v1286 = vmul.f32 %v379, %v1282
        %v1287 = vadd.f32 %v1267, %v1283
        %v1288 = vadd.f32 %v1268, %v1284
        %v1289 = vadd.f32 %v1269, %v1285
        %v1290 = vadd.f32 %v1270, %v1286
        %v1291 = vrot.slane %v1287, 4
        %v1292 = vadd.f32 %v1287, %v1291
        %v1293 = vrot.slane %v1292, 2
        %v1294 = vadd.f32 %v1292, %v1293
        %v1295 = vrot.slane %v1294, 1
        %v1296 = vadd.f32 %v1294, %v1295
        %v1297 = vrot.slane %v1288, 4
        %v1298 = vadd.f32 %v1288, %v1297
        %v1299 = vrot.slane %v1298, 2
        %v1300 = vadd.f32 %v1298, %v1299
        %v1301 = vrot.slane %v1300, 1
        %v1302 = vadd.f32 %v1300, %v1301
        %v1303 = vrot.slane %v1289, 4
        %v1304 = vadd.f32 %v1289, %v1303
        %v1305 = vrot.slane %v1304, 2
        %v1306 = vadd.f32 %v1304, %v1305
        %v1307 = vrot.slane %v1306, 1
        %v1308 = vadd.f32 %v1306, %v1307
        %v1309 = vrot.slane %v1290, 4
        %v1310 = vadd.f32 %v1290, %v1309
        %v1311 = vrot.slane %v1310, 2
        %v1312 = vadd.f32 %v1310, %v1311
        %v1313 = vrot.slane %v1312, 1
        %v1314 = vadd.f32 %v1312, %v1313
        %1315 = vrot.lane.b32.xlu0 %v232, 88
        %v1316 = vpop.permute.xlu0 %1315
        %1317 = vrot.lane.b32.xlu0 %v661, 88
        %v1318 = vpop.permute.xlu0 %1317
        %1319 = vrot.lane.b32.xlu0 %v233, 88
        %v1320 = vpop.permute.xlu0 %1319
        %1321 = vrot.lane.b32.xlu0 %v662, 88
        %v1322 = vpop.permute.xlu0 %1321
        %v1323 = vsel %vm1138, %v1320, %v1322
        %v1324 = vsel %vm1138, %v1318, %v1320
        %v1325 = vsel %vm1138, %v1316, %v1318
        %v1326 = vsel %vm1138, %v1322, %v1316
        %1327 = vrot.lane.b32.xlu0 %v682, 88
        %v1328 = vpop.permute.xlu0 %1327
        %1329 = vrot.lane.b32.xlu0 %v686, 88
        %v1330 = vpop.permute.xlu0 %1329
        %1331 = vrot.lane.b32.xlu0 %v690, 88
        %v1332 = vpop.permute.xlu0 %1331
        %1333 = vrot.lane.b32.xlu0 %v694, 88
        %v1334 = vpop.permute.xlu0 %1333
        %v1335 = vsel %vm1138, %v1332, %v1334
        %v1336 = vsel %vm1138, %v1330, %v1332
        %v1337 = vsel %vm1138, %v1328, %v1330
        %v1338 = vsel %vm1138, %v1334, %v1328
        %v1339 = vmul.f32 %v1337, %v1296
        %v1340 = vmul.f32 %v1336, %v1302
        %v1341 = vmul.f32 %v1335, %v1308
        %v1342 = vmul.f32 %v1338, %v1314
        %v1343 = vlaneseq
        %v1344 = vshrl.u32 %v1343, 7
        %v1345 = vsub.s32 0, %v1344
        %v1346 = vrot.slane %v1339, %v1345
        %v1347 = vlaneseq
        %v1348 = vshrl.u32 %v1347, 7
        %v1349 = vsub.s32 0, %v1348
        %v1350 = vrot.slane %v1340, %v1349
        %v1351 = vlaneseq
        %v1352 = vshrl.u32 %v1351, 7
        %v1353 = vsub.s32 0, %v1352
        %v1354 = vrot.slane %v1341, %v1353
        %v1355 = vlaneseq
        %v1356 = vshrl.u32 %v1355, 7
        %v1357 = vsub.s32 0, %v1356
        %v1358 = vrot.slane %v1342, %v1357
        %v1359 = vmul.f32 %v1325, %v1346
        %v1360 = vmul.f32 %v1324, %v1350
        %v1361 = vmul.f32 %v1323, %v1354
        %v1362 = vmul.f32 %v1326, %v1358
        %v1367 = vcombine.low %v1359, %v1360
        %v1368 = vcombine.low %v1361, %v1362
        %v1371 = vadd.f32 %v1128, %v1367
        %v1372 = vadd.f32 %v1129, %v1368
        %1373 = vrot.lane.b32.xlu0 %v1296, 40
        %v1374 = vpop.permute.xlu0 %1373
        %1375 = vrot.lane.b32.xlu0 %v1302, 40
        %v1376 = vpop.permute.xlu0 %1375
        %1377 = vrot.lane.b32.xlu0 %v1308, 40
        %v1378 = vpop.permute.xlu0 %1377
        %1379 = vrot.lane.b32.xlu0 %v1314, 40
        %v1380 = vpop.permute.xlu0 %1379
        %vm1381 = vcmp.lt.s32.totalorder %v481, 40
        %v1382 = vsel %vm1381, %v1378, %v1380
        %v1383 = vsel %vm1381, %v1376, %v1378
        %v1384 = vsel %vm1381, %v1374, %v1376
        %v1385 = vsel %vm1381, %v1380, %v1374
        %1386 = vrot.lane.b32.xlu0 %v232, 40
        %v1387 = vpop.permute.xlu0 %1386
        %1388 = vrot.lane.b32.xlu0 %v661, 40
        %v1389 = vpop.permute.xlu0 %1388
        %1390 = vrot.lane.b32.xlu0 %v233, 40
        %v1391 = vpop.permute.xlu0 %1390
        %1392 = vrot.lane.b32.xlu0 %v662, 40
        %v1393 = vpop.permute.xlu0 %1392
        %v1394 = vsel %vm1381, %v1391, %v1393
        %v1395 = vsel %vm1381, %v1389, %v1391
        %v1396 = vsel %vm1381, %v1387, %v1389
        %v1397 = vsel %vm1381, %v1393, %v1387
        %1398 = vrot.lane.b32.xlu0 %v682, 40
        %v1399 = vpop.permute.xlu0 %1398
        %1400 = vrot.lane.b32.xlu0 %v686, 40
        %v1401 = vpop.permute.xlu0 %1400
        %1402 = vrot.lane.b32.xlu0 %v690, 40
        %v1403 = vpop.permute.xlu0 %1402
        %1404 = vrot.lane.b32.xlu0 %v694, 40
        %v1405 = vpop.permute.xlu0 %1404
        %v1406 = vsel %vm1381, %v1403, %v1405
        %v1407 = vsel %vm1381, %v1401, %v1403
        %v1408 = vsel %vm1381, %v1399, %v1401
        %v1409 = vsel %vm1381, %v1405, %v1399
        %v1410 = vmul.f32 %v1409, %v1385
        %v1411 = vmul.f32 %v1408, %v1384
        %v1412 = vmul.f32 %v1407, %v1383
        %v1413 = vmul.f32 %v1406, %v1382
        %v1414 = vlaneseq
        %v1415 = vshrl.u32 %v1414, 7
        %v1416 = vsub.s32 0, %v1415
        %v1417 = vrot.slane %v1410, %v1416
        %v1418 = vlaneseq
        %v1419 = vshrl.u32 %v1418, 7
        %v1420 = vsub.s32 0, %v1419
        %v1421 = vrot.slane %v1411, %v1420
        %v1422 = vlaneseq
        %v1423 = vshrl.u32 %v1422, 7
        %v1424 = vsub.s32 0, %v1423
        %v1425 = vrot.slane %v1412, %v1424
        %v1426 = vlaneseq
        %v1427 = vshrl.u32 %v1426, 7
        %v1428 = vsub.s32 0, %v1427
        %v1429 = vrot.slane %v1413, %v1428
        %v1430 = vmul.f32 %v1397, %v1417
        %v1431 = vmul.f32 %v1396, %v1421
        %v1432 = vmul.f32 %v1395, %v1425
        %v1433 = vmul.f32 %v1394, %v1429
        %v1438 = vcombine.low %v1430, %v1431
        %v1439 = vcombine.low %v1432, %v1433
        %v1442 = vadd.f32 %v1371, %v1438
        %v1443 = vadd.f32 %v1372, %v1439
        %1444 = vrot.lane.b32.xlu0 %v292, 86
        %v1445 = vpop.permute.xlu0 %1444
        %1446 = vrot.lane.b32.xlu0 %v293, 86
        %v1447 = vpop.permute.xlu0 %1446
        %1448 = vrot.lane.b32.xlu0 %v294, 86
        %v1449 = vpop.permute.xlu0 %1448
        %1450 = vrot.lane.b32.xlu0 %v295, 86
        %v1451 = vpop.permute.xlu0 %1450
        %vm1452 = vcmp.lt.s32.totalorder %v481, 86
        %v1453 = vsel %vm1452, %v1449, %v1451
        %v1454 = vsel %vm1452, %v1447, %v1449
        %v1455 = vsel %vm1452, %v1445, %v1447
        %v1456 = vsel %vm1452, %v1451, %v1445
        %v1457 = vmul.f32 %v292, %v1455
        %v1458 = vmul.f32 %v293, %v1454
        %v1459 = vmul.f32 %v294, %v1453
        %v1460 = vmul.f32 %v295, %v1456
        %v1461 = vadd.f32 %v1457, 0.0
        %v1462 = vadd.f32 %v1458, 0.0
        %v1463 = vadd.f32 %v1459, 0.0
        %v1464 = vadd.f32 %v1460, 0.0
        %1465 = vrot.lane.b32.xlu0 %v304, 86
        %v1466 = vpop.permute.xlu0 %1465
        %1467 = vrot.lane.b32.xlu0 %v305, 86
        %v1468 = vpop.permute.xlu0 %1467
        %1469 = vrot.lane.b32.xlu0 %v306, 86
        %v1470 = vpop.permute.xlu0 %1469
        %1471 = vrot.lane.b32.xlu0 %v307, 86
        %v1472 = vpop.permute.xlu0 %1471
        %v1473 = vsel %vm1452, %v1470, %v1472
        %v1474 = vsel %vm1452, %v1468, %v1470
        %v1475 = vsel %vm1452, %v1466, %v1468
        %v1476 = vsel %vm1452, %v1472, %v1466
        %v1477 = vmul.f32 %v304, %v1475
        %v1478 = vmul.f32 %v305, %v1474
        %v1479 = vmul.f32 %v306, %v1473
        %v1480 = vmul.f32 %v307, %v1476
        %v1481 = vadd.f32 %v1461, %v1477
        %v1482 = vadd.f32 %v1462, %v1478
        %v1483 = vadd.f32 %v1463, %v1479
        %v1484 = vadd.f32 %v1464, %v1480
        %1485 = vrot.lane.b32.xlu0 %v316, 86
        %v1486 = vpop.permute.xlu0 %1485
        %1487 = vrot.lane.b32.xlu0 %v317, 86
        %v1488 = vpop.permute.xlu0 %1487
        %1489 = vrot.lane.b32.xlu0 %v318, 86
        %v1490 = vpop.permute.xlu0 %1489
        %1491 = vrot.lane.b32.xlu0 %v319, 86
        %v1492 = vpop.permute.xlu0 %1491
        %v1493 = vsel %vm1452, %v1490, %v1492
        %v1494 = vsel %vm1452, %v1488, %v1490
        %v1495 = vsel %vm1452, %v1486, %v1488
        %v1496 = vsel %vm1452, %v1492, %v1486
        %v1497 = vmul.f32 %v316, %v1495
        %v1498 = vmul.f32 %v317, %v1494
        %v1499 = vmul.f32 %v318, %v1493
        %v1500 = vmul.f32 %v319, %v1496
        %v1501 = vadd.f32 %v1481, %v1497
        %v1502 = vadd.f32 %v1482, %v1498
        %v1503 = vadd.f32 %v1483, %v1499
        %v1504 = vadd.f32 %v1484, %v1500
        %1505 = vrot.lane.b32.xlu0 %v328, 86
        %v1506 = vpop.permute.xlu0 %1505
        %1507 = vrot.lane.b32.xlu0 %v329, 86
        %v1508 = vpop.permute.xlu0 %1507
        %1509 = vrot.lane.b32.xlu0 %v330, 86
        %v1510 = vpop.permute.xlu0 %1509
        %1511 = vrot.lane.b32.xlu0 %v331, 86
        %v1512 = vpop.permute.xlu0 %1511
        %v1513 = vsel %vm1452, %v1510, %v1512
        %v1514 = vsel %vm1452, %v1508, %v1510
        %v1515 = vsel %vm1452, %v1506, %v1508
        %v1516 = vsel %vm1452, %v1512, %v1506
        %v1517 = vmul.f32 %v328, %v1515
        %v1518 = vmul.f32 %v329, %v1514
        %v1519 = vmul.f32 %v330, %v1513
        %v1520 = vmul.f32 %v331, %v1516
        %v1521 = vadd.f32 %v1501, %v1517
        %v1522 = vadd.f32 %v1502, %v1518
        %v1523 = vadd.f32 %v1503, %v1519
        %v1524 = vadd.f32 %v1504, %v1520
        %1525 = vrot.lane.b32.xlu0 %v340, 86
        %v1526 = vpop.permute.xlu0 %1525
        %1527 = vrot.lane.b32.xlu0 %v341, 86
        %v1528 = vpop.permute.xlu0 %1527
        %1529 = vrot.lane.b32.xlu0 %v342, 86
        %v1530 = vpop.permute.xlu0 %1529
        %1531 = vrot.lane.b32.xlu0 %v343, 86
        %v1532 = vpop.permute.xlu0 %1531
        %v1533 = vsel %vm1452, %v1530, %v1532
        %v1534 = vsel %vm1452, %v1528, %v1530
        %v1535 = vsel %vm1452, %v1526, %v1528
        %v1536 = vsel %vm1452, %v1532, %v1526
        %v1537 = vmul.f32 %v340, %v1535
        %v1538 = vmul.f32 %v341, %v1534
        %v1539 = vmul.f32 %v342, %v1533
        %v1540 = vmul.f32 %v343, %v1536
        %v1541 = vadd.f32 %v1521, %v1537
        %v1542 = vadd.f32 %v1522, %v1538
        %v1543 = vadd.f32 %v1523, %v1539
        %v1544 = vadd.f32 %v1524, %v1540
        %1545 = vrot.lane.b32.xlu0 %v352, 86
        %v1546 = vpop.permute.xlu0 %1545
        %1547 = vrot.lane.b32.xlu0 %v353, 86
        %v1548 = vpop.permute.xlu0 %1547
        %1549 = vrot.lane.b32.xlu0 %v354, 86
        %v1550 = vpop.permute.xlu0 %1549
        %1551 = vrot.lane.b32.xlu0 %v355, 86
        %v1552 = vpop.permute.xlu0 %1551
        %v1553 = vsel %vm1452, %v1550, %v1552
        %v1554 = vsel %vm1452, %v1548, %v1550
        %v1555 = vsel %vm1452, %v1546, %v1548
        %v1556 = vsel %vm1452, %v1552, %v1546
        %v1557 = vmul.f32 %v352, %v1555
        %v1558 = vmul.f32 %v353, %v1554
        %v1559 = vmul.f32 %v354, %v1553
        %v1560 = vmul.f32 %v355, %v1556
        %v1561 = vadd.f32 %v1541, %v1557
        %v1562 = vadd.f32 %v1542, %v1558
        %v1563 = vadd.f32 %v1543, %v1559
        %v1564 = vadd.f32 %v1544, %v1560
        %1565 = vrot.lane.b32.xlu0 %v364, 86
        %v1566 = vpop.permute.xlu0 %1565
        %1567 = vrot.lane.b32.xlu0 %v365, 86
        %v1568 = vpop.permute.xlu0 %1567
        %1569 = vrot.lane.b32.xlu0 %v366, 86
        %v1570 = vpop.permute.xlu0 %1569
        %1571 = vrot.lane.b32.xlu0 %v367, 86
        %v1572 = vpop.permute.xlu0 %1571
        %v1573 = vsel %vm1452, %v1570, %v1572
        %v1574 = vsel %vm1452, %v1568, %v1570
        %v1575 = vsel %vm1452, %v1566, %v1568
        %v1576 = vsel %vm1452, %v1572, %v1566
        %v1577 = vmul.f32 %v364, %v1575
        %v1578 = vmul.f32 %v365, %v1574
        %v1579 = vmul.f32 %v366, %v1573
        %v1580 = vmul.f32 %v367, %v1576
        %v1581 = vadd.f32 %v1561, %v1577
        %v1582 = vadd.f32 %v1562, %v1578
        %v1583 = vadd.f32 %v1563, %v1579
        %v1584 = vadd.f32 %v1564, %v1580
        %1585 = vrot.lane.b32.xlu0 %v376, 86
        %v1586 = vpop.permute.xlu0 %1585
        %1587 = vrot.lane.b32.xlu0 %v377, 86
        %v1588 = vpop.permute.xlu0 %1587
        %1589 = vrot.lane.b32.xlu0 %v378, 86
        %v1590 = vpop.permute.xlu0 %1589
        %1591 = vrot.lane.b32.xlu0 %v379, 86
        %v1592 = vpop.permute.xlu0 %1591
        %v1593 = vsel %vm1452, %v1590, %v1592
        %v1594 = vsel %vm1452, %v1588, %v1590
        %v1595 = vsel %vm1452, %v1586, %v1588
        %v1596 = vsel %vm1452, %v1592, %v1586
        %v1597 = vmul.f32 %v376, %v1595
        %v1598 = vmul.f32 %v377, %v1594
        %v1599 = vmul.f32 %v378, %v1593
        %v1600 = vmul.f32 %v379, %v1596
        %v1601 = vadd.f32 %v1581, %v1597
        %v1602 = vadd.f32 %v1582, %v1598
        %v1603 = vadd.f32 %v1583, %v1599
        %v1604 = vadd.f32 %v1584, %v1600
        %v1605 = vrot.slane %v1601, 4
        %v1606 = vadd.f32 %v1601, %v1605
        %v1607 = vrot.slane %v1606, 2
        %v1608 = vadd.f32 %v1606, %v1607
        %v1609 = vrot.slane %v1608, 1
        %v1610 = vadd.f32 %v1608, %v1609
        %v1611 = vrot.slane %v1602, 4
        %v1612 = vadd.f32 %v1602, %v1611
        %v1613 = vrot.slane %v1612, 2
        %v1614 = vadd.f32 %v1612, %v1613
        %v1615 = vrot.slane %v1614, 1
        %v1616 = vadd.f32 %v1614, %v1615
        %v1617 = vrot.slane %v1603, 4
        %v1618 = vadd.f32 %v1603, %v1617
        %v1619 = vrot.slane %v1618, 2
        %v1620 = vadd.f32 %v1618, %v1619
        %v1621 = vrot.slane %v1620, 1
        %v1622 = vadd.f32 %v1620, %v1621
        %v1623 = vrot.slane %v1604, 4
        %v1624 = vadd.f32 %v1604, %v1623
        %v1625 = vrot.slane %v1624, 2
        %v1626 = vadd.f32 %v1624, %v1625
        %v1627 = vrot.slane %v1626, 1
        %v1628 = vadd.f32 %v1626, %v1627
        %1629 = vrot.lane.b32.xlu0 %v232, 86
        %v1630 = vpop.permute.xlu0 %1629
        %1631 = vrot.lane.b32.xlu0 %v661, 86
        %v1632 = vpop.permute.xlu0 %1631
        %1633 = vrot.lane.b32.xlu0 %v233, 86
        %v1634 = vpop.permute.xlu0 %1633
        %1635 = vrot.lane.b32.xlu0 %v662, 86
        %v1636 = vpop.permute.xlu0 %1635
        %v1637 = vsel %vm1452, %v1634, %v1636
        %v1638 = vsel %vm1452, %v1632, %v1634
        %v1639 = vsel %vm1452, %v1630, %v1632
        %v1640 = vsel %vm1452, %v1636, %v1630
        %1641 = vrot.lane.b32.xlu0 %v682, 86
        %v1642 = vpop.permute.xlu0 %1641
        %1643 = vrot.lane.b32.xlu0 %v686, 86
        %v1644 = vpop.permute.xlu0 %1643
        %1645 = vrot.lane.b32.xlu0 %v690, 86
        %v1646 = vpop.permute.xlu0 %1645
        %1647 = vrot.lane.b32.xlu0 %v694, 86
        %v1648 = vpop.permute.xlu0 %1647
        %v1649 = vsel %vm1452, %v1646, %v1648
        %v1650 = vsel %vm1452, %v1644, %v1646
        %v1651 = vsel %vm1452, %v1642, %v1644
        %v1652 = vsel %vm1452, %v1648, %v1642
        %v1653 = vmul.f32 %v1651, %v1610
        %v1654 = vmul.f32 %v1650, %v1616
        %v1655 = vmul.f32 %v1649, %v1622
        %v1656 = vmul.f32 %v1652, %v1628
        %v1657 = vlaneseq
        %v1658 = vshrl.u32 %v1657, 7
        %v1659 = vsub.s32 0, %v1658
        %v1660 = vrot.slane %v1653, %v1659
        %v1661 = vlaneseq
        %v1662 = vshrl.u32 %v1661, 7
        %v1663 = vsub.s32 0, %v1662
        %v1664 = vrot.slane %v1654, %v1663
        %v1665 = vlaneseq
        %v1666 = vshrl.u32 %v1665, 7
        %v1667 = vsub.s32 0, %v1666
        %v1668 = vrot.slane %v1655, %v1667
        %v1669 = vlaneseq
        %v1670 = vshrl.u32 %v1669, 7
        %v1671 = vsub.s32 0, %v1670
        %v1672 = vrot.slane %v1656, %v1671
        %v1673 = vmul.f32 %v1639, %v1660
        %v1674 = vmul.f32 %v1638, %v1664
        %v1675 = vmul.f32 %v1637, %v1668
        %v1676 = vmul.f32 %v1640, %v1672
        %v1681 = vcombine.low %v1673, %v1674
        %v1682 = vcombine.low %v1675, %v1676
        %v1685 = vadd.f32 %v1442, %v1681
        %v1686 = vadd.f32 %v1443, %v1682
        %1687 = vrot.lane.b32.xlu0 %v1610, 42
        %v1688 = vpop.permute.xlu0 %1687
        %1689 = vrot.lane.b32.xlu0 %v1616, 42
        %v1690 = vpop.permute.xlu0 %1689
        %1691 = vrot.lane.b32.xlu0 %v1622, 42
        %v1692 = vpop.permute.xlu0 %1691
        %1693 = vrot.lane.b32.xlu0 %v1628, 42
        %v1694 = vpop.permute.xlu0 %1693
        %vm1695 = vcmp.lt.s32.totalorder %v481, 42
        %v1696 = vsel %vm1695, %v1692, %v1694
        %v1697 = vsel %vm1695, %v1690, %v1692
        %v1698 = vsel %vm1695, %v1688, %v1690
        %v1699 = vsel %vm1695, %v1694, %v1688
        %1700 = vrot.lane.b32.xlu0 %v232, 42
        %v1701 = vpop.permute.xlu0 %1700
        %1702 = vrot.lane.b32.xlu0 %v661, 42
        %v1703 = vpop.permute.xlu0 %1702
        %1704 = vrot.lane.b32.xlu0 %v233, 42
        %v1705 = vpop.permute.xlu0 %1704
        %1706 = vrot.lane.b32.xlu0 %v662, 42
        %v1707 = vpop.permute.xlu0 %1706
        %v1708 = vsel %vm1695, %v1705, %v1707
        %v1709 = vsel %vm1695, %v1703, %v1705
        %v1710 = vsel %vm1695, %v1701, %v1703
        %v1711 = vsel %vm1695, %v1707, %v1701
        %1712 = vrot.lane.b32.xlu0 %v682, 42
        %v1713 = vpop.permute.xlu0 %1712
        %1714 = vrot.lane.b32.xlu0 %v686, 42
        %v1715 = vpop.permute.xlu0 %1714
        %1716 = vrot.lane.b32.xlu0 %v690, 42
        %v1717 = vpop.permute.xlu0 %1716
        %1718 = vrot.lane.b32.xlu0 %v694, 42
        %v1719 = vpop.permute.xlu0 %1718
        %v1720 = vsel %vm1695, %v1717, %v1719
        %v1721 = vsel %vm1695, %v1715, %v1717
        %v1722 = vsel %vm1695, %v1713, %v1715
        %v1723 = vsel %vm1695, %v1719, %v1713
        %v1724 = vmul.f32 %v1723, %v1699
        %v1725 = vmul.f32 %v1722, %v1698
        %v1726 = vmul.f32 %v1721, %v1697
        %v1727 = vmul.f32 %v1720, %v1696
        %v1728 = vlaneseq
        %v1729 = vshrl.u32 %v1728, 7
        %v1730 = vsub.s32 0, %v1729
        %v1731 = vrot.slane %v1724, %v1730
        %v1732 = vlaneseq
        %v1733 = vshrl.u32 %v1732, 7
        %v1734 = vsub.s32 0, %v1733
        %v1735 = vrot.slane %v1725, %v1734
        %v1736 = vlaneseq
        %v1737 = vshrl.u32 %v1736, 7
        %v1738 = vsub.s32 0, %v1737
        %v1739 = vrot.slane %v1726, %v1738
        %v1740 = vlaneseq
        %v1741 = vshrl.u32 %v1740, 7
        %v1742 = vsub.s32 0, %v1741
        %v1743 = vrot.slane %v1727, %v1742
        %v1744 = vmul.f32 %v1711, %v1731
        %v1745 = vmul.f32 %v1710, %v1735
        %v1746 = vmul.f32 %v1709, %v1739
        %v1747 = vmul.f32 %v1708, %v1743
        %v1752 = vcombine.low %v1744, %v1745
        %v1753 = vcombine.low %v1746, %v1747
        %v1756 = vadd.f32 %v1685, %v1752
        %v1757 = vadd.f32 %v1686, %v1753
        %v1758 = vmul.f32 %v1756, 0.2
        %v1759 = vmul.f32 %v1757, 0.2
        %v1760 = vadd.f32 %v232, %v1758
        %v1761 = vadd.f32 %v233, %v1759
        %1762 = vst [vmem:[%s231] sm:$0xff] %v1760
        %1763 = vst [vmem:[%s231 + $0x8] sm:$0xff] %v1761
        %p1764 = scmp.lt.s32.totalorder %s16, 1
        %s1765 = scalar_select %p1764, %s16, 1
        %s1766 = smul.addr %s1765, 4
        %s1767 = smul.addr %s1766, 4
        %s1768 = scalar_lea.vmem %s4, %s1767
        // Predicated region
        $region41: #{message_pass.1} parent=35 // pred_check
          %p1769 = pneg %p128
        $region42: #{message_pass.1} parent=35 // pred_check_branch
          %1771 = sbr.rel (%p1769) target = $region44
        $region43: #{message_pass.1} parent=35 // pred_region
          _
        $region44: #{message_pass.1} parent=35 // pred_fallthru
          _
      $region36: #{message_pass.1} parent=5 // pred_fallthru
        _
      %p1772 = scmp.le.s32.totalorder 2, %s11
      // Predicated region
      $region45: #{message_pass.1} parent=5 // pred_check
        %p1773 = pneg %p1772
      $region46: #{message_pass.1} parent=5 // pred_check_branch
        %1775 = sbr.rel (%p1773) target = $region48
      $region47: #{message_pass.1} parent=5 // pred_region
        %s1776 = ssub.s32 %s11, 2
        // Predicated region
        $region49: #{message_pass.1} parent=47 // pred_check
          %p1777 = pneg %p134
        $region50: #{message_pass.1} parent=47 // pred_check_branch
          %1779 = sbr.rel (%p1777) target = $region52
        $region51: #{message_pass.1} parent=47 // pred_region
          %p1780 = scmp.lt.s32.totalorder %s17, 1
          %s1781 = scalar_select %p1780, %s17, 1
          %s1782 = smul.addr %s1781, 4
          %s1783 = smul.addr %s1782, 4
          %s1784 = scalar_lea.vmem %s4, %s1783
        $region52: #{message_pass.1} parent=47 // pred_fallthru
          _
      $region48: #{message_pass.1} parent=5 // pred_fallthru
        _
    $region6: #{message_pass.1} parent=1 // loop_footer
      %s15 = sadd.s32 1, %s11
    $region7: #{message_pass.1} parent=1 // loop_footer_branch
      %10 = sbr.rel target = $region3
    $region8: #{message_pass.1} parent=1 // loop_exit
      _
    %1785 = vsyncpa [#allocation3], 1
    %s1786 = scalar_lea.sflag [#allocation3], 1
    %1787 = vsyncpa %s1786, 1

</llo_original>
